<compile_context>
chip_gen: v6e
topology: v6e:2x2x1
jax: 0.10.0
libtpu: 0.0.40
codegen_flags: <defaults>
</compile_context>

<pallas_src>
import functools

import jax
import jax.numpy as jnp
from jax.experimental import pallas as pl
from jax.experimental.pallas import tpu as pltpu


# ---------------------------------------------------------------------------
# Kernel 1: conv-as-matmul + bias + 2x2 maxpool + relu, fully fused.
# ---------------------------------------------------------------------------
def _conv_pool_relu_kernel(p_ref, w_ref, b_ref, o_ref):
    """p_ref: [4*M, K] im2col patches, rows grouped window-position-major so the
    four 2x2-pool positions are 4 contiguous chunks of M rows.
    w_ref: [K, C] conv weight (im2col layout), b_ref: [1, C], o_ref: [M, C]."""
    c = jnp.dot(p_ref[...], w_ref[...], preferred_element_type=jnp.float32)
    c = c + b_ref[...]
    m = o_ref.shape[0]
    pooled = jnp.maximum(jnp.maximum(c[0 * m:1 * m], c[1 * m:2 * m]),
                         jnp.maximum(c[2 * m:3 * m], c[3 * m:4 * m]))
    o_ref[...] = jnp.maximum(pooled, 0.0)


# ---------------------------------------------------------------------------
# Kernel 2: conv2 + pool + relu + fc1/relu/fc2 + comparison MLP head, fused.
# ---------------------------------------------------------------------------
def _conv2_fc_head_kernel(p_ref, wc_ref, bc_ref,
                          w1_ref, b1_ref, w2_ref, b2_ref,
                          w3a_ref, w3b_ref, b3_ref,
                          w4_ref, b4_ref, w5_ref, b5_ref,
                          digits_ref, comp_ref, *, n_img, batch):
    f32 = jnp.float32
    # conv2 (im2col matmul) + bias
    c = jnp.dot(p_ref[...], wc_ref[...], preferred_element_type=f32) + bc_ref[...]
    # 2x2 maxpool + relu: rows are window-position-major -> max of 4 chunks
    m = 4 * n_img                               # 4 pooled spatial positions x n_img
    pooled = jnp.maximum(jnp.maximum(c[0 * m:1 * m], c[1 * m:2 * m]),
                         jnp.maximum(c[2 * m:3 * m], c[3 * m:4 * m]))
    pooled = jnp.maximum(pooled, 0.0)           # [4*n_img, 64], row = pos*n_img + img

    # flatten + fc1 + relu (flatten folded into a split matmul: one K-slab per pos)
    cout = pooled.shape[1]                      # 64
    h = b1_ref[...]
    for pos in range(4):
        h = h + jnp.dot(pooled[pos * n_img:(pos + 1) * n_img],
                        w1_ref[pos * cout:(pos + 1) * cout],
                        preferred_element_type=f32)
    h = jnp.maximum(h, 0.0)                     # [n_img, 200]

    # fc2 -> per-digit logits (both shared-weight branches at once)
    digits = jnp.dot(h, w2_ref[...], preferred_element_type=f32) + b2_ref[...]
    digits_ref[...] = digits                    # [n_img, 10]

    # comparison head: cat(out1, out2) @ w_fc3 == out1 @ w3a + out2 @ w3b
    d1 = digits[:batch]                         # channel-0 digit logits
    d2 = digits[batch:2 * batch]                # channel-1 digit logits
    h3 = jnp.maximum(jnp.dot(d1, w3a_ref[...], preferred_element_type=f32)
                     + jnp.dot(d2, w3b_ref[...], preferred_element_type=f32)
                     + b3_ref[...], 0.0)        # [batch, 300]
    h4 = jnp.maximum(jnp.dot(h3, w4_ref[...], preferred_element_type=f32)
                     + b4_ref[...], 0.0)        # [batch, 300]
    comp_ref[...] = jnp.dot(h4, w5_ref[...], preferred_element_type=f32) + b5_ref[...]


# ---------------------------------------------------------------------------
# pallas_call wrappers (tiny problem -> single full-array blocks, grid=(1,))
# ---------------------------------------------------------------------------
def conv_pool_relu(patches, w, b):
    m4, k = patches.shape
    m = m4 // 4
    c = w.shape[1]
    return pl.pallas_call(
        _conv_pool_relu_kernel,
        out_shape=jax.ShapeDtypeStruct((m, c), jnp.float32),
        grid=(1,),
        in_specs=[pl.BlockSpec((m4, k), lambda i: (0, 0)),
                  pl.BlockSpec((k, c), lambda i: (0, 0)),
                  pl.BlockSpec((1, c), lambda i: (0, 0))],
        out_specs=pl.BlockSpec((m, c), lambda i: (0, 0)),
        compiler_params=pltpu.CompilerParams(dimension_semantics=("arbitrary",)),
    )(patches, w, b)


def conv2_fc_head(patches, p, *, n_img, batch):
    kern = functools.partial(_conv2_fc_head_kernel, n_img=n_img, batch=batch)
    args = (patches,
            p["w_conv2"], p["b_conv2"],
            p["w_fc1"], p["b_fc1"], p["w_fc2"], p["b_fc2"],
            p["w_fc3a"], p["w_fc3b"], p["b_fc3"],
            p["w_fc4"], p["b_fc4"], p["w_fc5"], p["b_fc5"])
    in_specs = [pl.BlockSpec(a.shape, lambda i: (0, 0)) for a in args]
    out_shape = (jax.ShapeDtypeStruct((n_img, 10), jnp.float32),
                 jax.ShapeDtypeStruct((batch, 2), jnp.float32))
    out_specs = (pl.BlockSpec((n_img, 10), lambda i: (0, 0)),
                 pl.BlockSpec((batch, 2), lambda i: (0, 0)))
    return pl.pallas_call(
        kern,
        out_shape=out_shape,
        grid=(1,),
        in_specs=in_specs,
        out_specs=out_specs,
        compiler_params=pltpu.CompilerParams(dimension_semantics=("arbitrary",)),
    )(*args)


# ---------------------------------------------------------------------------
# XLA glue: im2col patch extraction with pool-friendly row ordering.
# TODO(synk): the im2col gathers still run as (cheap) XLA slices/transposes;
# pushing them inside the kernels needs in-kernel spatial reshapes that are
# not robustly lowerable at these odd shapes.
# ---------------------------------------------------------------------------
def _im2col(x, k):
    """x: [N, H, W, C] -> [N, OH, OW, k*k*C], feature order (ki, kj, cin)."""
    n, h, w, c = x.shape
    oh, ow = h - k + 1, w - k + 1
    cols = [x[:, i:i + oh, j:j + ow, :] for i in range(k) for j in range(k)]
    return jnp.stack(cols, axis=3).reshape(n, oh, ow, k * k * c)


def _pool_major_rows(p, *, img_major):
    """[N, OH, OW, K] (OH, OW even) -> [4*N*PH*PW, K] with rows grouped by the
    2x2 pooling-window position, so the pool is a max over 4 contiguous chunks
    inside the kernel.  img_major picks the within-chunk row order."""
    n, oh, ow, k = p.shape
    ph, pw = oh // 2, ow // 2
    p = p.reshape(n, ph, 2, pw, 2, k)
    if img_major:                       # chunk rows ordered (img, py, px)
        p = p.transpose(2, 4, 0, 1, 3, 5)
    else:                               # chunk rows ordered (py, px, img)
        p = p.transpose(2, 4, 1, 3, 0, 5)
    return p.reshape(4 * n * ph * pw, k)


# ---------------------------------------------------------------------------
# Model (weight sharing: both image channels use the same cnn params)
# ---------------------------------------------------------------------------
def init_params(key):
    def dense(key, fan_in, fan_out):
        kw, kb = jax.random.split(key)
        scale = 1.0 / jnp.sqrt(jnp.float32(fan_in))
        w = jax.random.uniform(kw, (fan_in, fan_out), jnp.float32, -scale, scale)
        b = jax.random.uniform(kb, (1, fan_out), jnp.float32, -scale, scale)
        return w, b

    keys = jax.random.split(key, 7)
    p = {}
    # Conv weights in im2col layout [k*k*Cin, Cout] (tap-major, cin inner).
    # TODO(synk): porting a real PyTorch checkpoint would need
    # conv.weight.permute(2,3,1,0).reshape(k*k*Cin, Cout) and a channel-major
    # flatten before fc1; synthetic self-consistent weights are used here.
    p["w_conv1"], p["b_conv1"] = dense(keys[0], 3 * 3 * 1, 32)
    p["w_conv2"], p["b_conv2"] = dense(keys[1], 3 * 3 * 32, 64)
    p["w_fc1"], p["b_fc1"] = dense(keys[2], 256, 200)
    p["w_fc2"], p["b_fc2"] = dense(keys[3], 200, 10)
    w_fc3, p["b_fc3"] = dense(keys[4], 20, 300)
    # Split fc3 rows so cat(out1, out2) @ w_fc3 == out1 @ w3a + out2 @ w3b
    p["w_fc3a"], p["w_fc3b"] = w_fc3[:10], w_fc3[10:]
    p["w_fc4"], p["b_fc4"] = dense(keys[5], 300, 300)
    p["w_fc5"], p["b_fc5"] = dense(keys[6], 300, 2)
    return p


def forward(x, p):
    """x: [B, 2, 14, 14] (NCHW) -> (out1 [B,10], out2 [B,10], comparison [B,2])."""
    x = x.astype(jnp.float32)
    b = x.shape[0]
    n_img = 2 * b
    # Weight sharing: run both digit images of every sample through the shared
    # cnn in ONE batched pass (first B rows = channel 0, last B = channel 1).
    imgs = jnp.swapaxes(x, 0, 1).reshape(n_img, 14, 14, 1)

    # Stage 1: conv1 + bias + 2x2 maxpool + relu (one fused kernel).
    pat1 = _pool_major_rows(_im2col(imgs, 3), img_major=True)      # [4*n_img*36, 9]
    pooled1 = conv_pool_relu(pat1, p["w_conv1"], p["b_conv1"])     # [n_img*36, 32]
    pooled1 = pooled1.reshape(n_img, 6, 6, 32)

    # Stage 2: conv2 + pool + relu + fc1/fc2 + comparison head (one fused kernel).
    pat2 = _pool_major_rows(_im2col(pooled1, 3), img_major=False)  # [4*4*n_img, 288]
    digits, comp = conv2_fc_head(pat2, p, n_img=n_img, batch=b)
    return digits[:b], digits[b:], comp


if __name__ == "__main__":
    key_in, key_param = jax.random.split(jax.random.PRNGKey(0))
    params = init_params(key_param)
    # PyTorch-style NCHW input: batch=2, two 14x14 grayscale digit images.
    x = jax.random.normal(key_in, (2, 2, 14, 14), dtype=jnp.float32)

    out1, out2, comp = jax.jit(forward)(x, params)
    jax.block_until_ready((out1, out2, comp))

    assert out1.shape == (2, 10)
    assert out2.shape == (2, 10)
    assert comp.shape == (2, 2)
    print("KERNEL_OK")
</pallas_src>

<mosaic_0001>
module attributes {stable_mosaic.version = 11 : i64} {
  func.func @_conv_pool_relu_kernel(%arg0: i32, %arg1: memref<576x9xf32, #tpu.memory_space<vmem>>, %arg2: memref<9x32xf32, #tpu.memory_space<vmem>>, %arg3: memref<1x32xf32, #tpu.memory_space<vmem>>, %arg4: memref<144x32xf32, #tpu.memory_space<vmem>>) attributes {dimension_semantics = [#tpu.dimension_semantics<arbitrary>], iteration_bounds = array<i64: 1>, scalar_prefetch = 0 : i64, scratch_operands = 0 : i64, tpu.core_type = #tpu.core_type<tc>, window_params = [{pipeline_mode = #tpu.pipeline_mode<synchronous>, transform_indices = @transform_0, window_bounds = array<i64: 576, 9>}, {pipeline_mode = #tpu.pipeline_mode<synchronous>, transform_indices = @transform_1, window_bounds = array<i64: 9, 32>}, {pipeline_mode = #tpu.pipeline_mode<synchronous>, transform_indices = @transform_2, window_bounds = array<i64: 1, 32>}, {pipeline_mode = #tpu.pipeline_mode<synchronous>, transform_indices = @transform_3, window_bounds = array<i64: 144, 32>}]} {
    %c0 = arith.constant 0 : index
    %c0_0 = arith.constant 0 : index
    %0 = vector.load %arg1[%c0, %c0_0] : memref<576x9xf32, #tpu.memory_space<vmem>>, vector<576x9xf32>
    %c0_1 = arith.constant 0 : index
    %c0_2 = arith.constant 0 : index
    %1 = vector.load %arg2[%c0_1, %c0_2] : memref<9x32xf32, #tpu.memory_space<vmem>>, vector<9x32xf32>
    %cst = arith.constant dense<0.000000e+00> : vector<576x32xf32>
    %2 = tpu.matmul %0, %1, %cst {dimension_numbers = #tpu.dot_dimension_numbers<[1], [0], [0], [1], [0, 0, 1, 1], [], []>} : vector<576x9xf32>, vector<9x32xf32>, vector<576x32xf32> -> vector<576x32xf32>
    %c0_3 = arith.constant 0 : index
    %c0_4 = arith.constant 0 : index
    %3 = vector.load %arg3[%c0_3, %c0_4] : memref<1x32xf32, #tpu.memory_space<vmem>>, vector<1x32xf32>
    %4 = vector.broadcast %3 : vector<1x32xf32> to vector<576x32xf32>
    %5 = arith.addf %2, %4 : vector<576x32xf32>
    %6 = vector.extract_strided_slice %5 {offsets = [0, 0], sizes = [144, 32], strides = [1, 1]} : vector<576x32xf32> to vector<144x32xf32>
    %7 = vector.extract_strided_slice %5 {offsets = [144, 0], sizes = [144, 32], strides = [1, 1]} : vector<576x32xf32> to vector<144x32xf32>
    %8 = arith.maximumf %6, %7 : vector<144x32xf32>
    %9 = vector.extract_strided_slice %5 {offsets = [288, 0], sizes = [144, 32], strides = [1, 1]} : vector<576x32xf32> to vector<144x32xf32>
    %10 = vector.extract_strided_slice %5 {offsets = [432, 0], sizes = [144, 32], strides = [1, 1]} : vector<576x32xf32> to vector<144x32xf32>
    %11 = arith.maximumf %9, %10 : vector<144x32xf32>
    %12 = arith.maximumf %8, %11 : vector<144x32xf32>
    %cst_5 = arith.constant 0.000000e+00 : f32
    %13 = vector.broadcast %cst_5 : f32 to vector<144x32xf32>
    %14 = arith.maximumf %12, %13 : vector<144x32xf32>
    %c0_6 = arith.constant 0 : index
    %c0_7 = arith.constant 0 : index
    %15 = vector.load %arg4[%c0_6, %c0_7] : memref<144x32xf32, #tpu.memory_space<vmem>>, vector<144x32xf32>
    tpu.vector_store %arg4[%c0_6, %c0_7], %14 {strides = array<i32>} : memref<144x32xf32, #tpu.memory_space<vmem>>, vector<144x32xf32>,
    return
  }
  func.func @transform_0(%arg0: i32) -> (i32, i32) {
    %c0_i32 = arith.constant 0 : i32
    %c0_i32_0 = arith.constant 0 : i32
    %c0_i32_1 = arith.constant 0 : i32
    return %c0_i32, %c0_i32_0 : i32, i32
  }
  func.func @transform_1(%arg0: i32) -> (i32, i32) {
    %c0_i32 = arith.constant 0 : i32
    %c0_i32_0 = arith.constant 0 : i32
    %c0_i32_1 = arith.constant 0 : i32
    return %c0_i32, %c0_i32_0 : i32, i32
  }
  func.func @transform_2(%arg0: i32) -> (i32, i32) {
    %c0_i32 = arith.constant 0 : i32
    %c0_i32_0 = arith.constant 0 : i32
    %c0_i32_1 = arith.constant 0 : i32
    return %c0_i32, %c0_i32_0 : i32, i32
  }
  func.func @transform_3(%arg0: i32) -> (i32, i32) {
    %c0_i32 = arith.constant 0 : i32
    %c0_i32_0 = arith.constant 0 : i32
    %c0_i32_1 = arith.constant 0 : i32
    return %c0_i32, %c0_i32_0 : i32, i32
  }
}

module attributes {stable_mosaic.version = 11 : i64} {
  func.func @_conv2_fc_head_kernel(%arg0: i32, %arg1: memref<64x288xf32, #tpu.memory_space<vmem>>, %arg2: memref<288x64xf32, #tpu.memory_space<vmem>>, %arg3: memref<1x64xf32, #tpu.memory_space<vmem>>, %arg4: memref<256x200xf32, #tpu.memory_space<vmem>>, %arg5: memref<1x200xf32, #tpu.memory_space<vmem>>, %arg6: memref<200x10xf32, #tpu.memory_space<vmem>>, %arg7: memref<1x10xf32, #tpu.memory_space<vmem>>, %arg8: memref<10x300xf32, #tpu.memory_space<vmem>>, %arg9: memref<10x300xf32, #tpu.memory_space<vmem>>, %arg10: memref<1x300xf32, #tpu.memory_space<vmem>>, %arg11: memref<300x300xf32, #tpu.memory_space<vmem>>, %arg12: memref<1x300xf32, #tpu.memory_space<vmem>>, %arg13: memref<300x2xf32, #tpu.memory_space<vmem>>, %arg14: memref<1x2xf32, #tpu.memory_space<vmem>>, %arg15: memref<4x10xf32, #tpu.memory_space<vmem>>, %arg16: memref<2x2xf32, #tpu.memory_space<vmem>>) attributes {dimension_semantics = [#tpu.dimension_semantics<arbitrary>], iteration_bounds = array<i64: 1>, scalar_prefetch = 0 : i64, scratch_operands = 0 : i64, tpu.core_type = #tpu.core_type<tc>, window_params = [{pipeline_mode = #tpu.pipeline_mode<synchronous>, transform_indices = @transform_0, window_bounds = array<i64: 64, 288>}, {pipeline_mode = #tpu.pipeline_mode<synchronous>, transform_indices = @transform_1, window_bounds = array<i64: 288, 64>}, {pipeline_mode = #tpu.pipeline_mode<synchronous>, transform_indices = @transform_2, window_bounds = array<i64: 1, 64>}, {pipeline_mode = #tpu.pipeline_mode<synchronous>, transform_indices = @transform_3, window_bounds = array<i64: 256, 200>}, {pipeline_mode = #tpu.pipeline_mode<synchronous>, transform_indices = @transform_4, window_bounds = array<i64: 1, 200>}, {pipeline_mode = #tpu.pipeline_mode<synchronous>, transform_indices = @transform_5, window_bounds = array<i64: 200, 10>}, {pipeline_mode = #tpu.pipeline_mode<synchronous>, transform_indices = @transform_6, window_bounds = array<i64: 1, 10>}, {pipeline_mode = #tpu.pipeline_mode<synchronous>, transform_indices = @transform_7, window_bounds = array<i64: 10, 300>}, {pipeline_mode = #tpu.pipeline_mode<synchronous>, transform_indices = @transform_8, window_bounds = array<i64: 10, 300>}, {pipeline_mode = #tpu.pipeline_mode<synchronous>, transform_indices = @transform_9, window_bounds = array<i64: 1, 300>}, {pipeline_mode = #tpu.pipeline_mode<synchronous>, transform_indices = @transform_10, window_bounds = array<i64: 300, 300>}, {pipeline_mode = #tpu.pipeline_mode<synchronous>, transform_indices = @transform_11, window_bounds = array<i64: 1, 300>}, {pipeline_mode = #tpu.pipeline_mode<synchronous>, transform_indices = @transform_12, window_bounds = array<i64: 300, 2>}, {pipeline_mode = #tpu.pipeline_mode<synchronous>, transform_indices = @transform_13, window_bounds = array<i64: 1, 2>}, {pipeline_mode = #tpu.pipeline_mode<synchronous>, transform_indices = @transform_14, window_bounds = array<i64: 4, 10>}, {pipeline_mode = #tpu.pipeline_mode<synchronous>, transform_indices = @transform_15, window_bounds = array<i64: 2, 2>}]} {
    %c0 = arith.constant 0 : index
    %c0_0 = arith.constant 0 : index
    %0 = vector.load %arg1[%c0, %c0_0] : memref<64x288xf32, #tpu.memory_space<vmem>>, vector<64x288xf32>
    %c0_1 = arith.constant 0 : index
    %c0_2 = arith.constant 0 : index
    %1 = vector.load %arg2[%c0_1, %c0_2] : memref<288x64xf32, #tpu.memory_space<vmem>>, vector<288x64xf32>
    %cst = arith.constant dense<0.000000e+00> : vector<64x64xf32>
    %2 = tpu.matmul %0, %1, %cst {dimension_numbers = #tpu.dot_dimension_numbers<[1], [0], [0], [1], [0, 0, 1, 1], [], []>} : vector<64x288xf32>, vector<288x64xf32>, vector<64x64xf32> -> vector<64x64xf32>
    %c0_3 = arith.constant 0 : index
    %c0_4 = arith.constant 0 : index
    %3 = vector.load %arg3[%c0_3, %c0_4] : memref<1x64xf32, #tpu.memory_space<vmem>>, vector<1x64xf32>
    %4 = vector.broadcast %3 : vector<1x64xf32> to vector<64x64xf32>
    %5 = arith.addf %2, %4 : vector<64x64xf32>
    %6 = vector.extract_strided_slice %5 {offsets = [0, 0], sizes = [16, 64], strides = [1, 1]} : vector<64x64xf32> to vector<16x64xf32>
    %7 = vector.extract_strided_slice %5 {offsets = [16, 0], sizes = [16, 64], strides = [1, 1]} : vector<64x64xf32> to vector<16x64xf32>
    %8 = arith.maximumf %6, %7 : vector<16x64xf32>
    %9 = vector.extract_strided_slice %5 {offsets = [32, 0], sizes = [16, 64], strides = [1, 1]} : vector<64x64xf32> to vector<16x64xf32>
    %10 = vector.extract_strided_slice %5 {offsets = [48, 0], sizes = [16, 64], strides = [1, 1]} : vector<64x64xf32> to vector<16x64xf32>
    %11 = arith.maximumf %9, %10 : vector<16x64xf32>
    %12 = arith.maximumf %8, %11 : vector<16x64xf32>
    %cst_5 = arith.constant 0.000000e+00 : f32
    %13 = vector.broadcast %cst_5 : f32 to vector<16x64xf32>
    %14 = arith.maximumf %12, %13 : vector<16x64xf32>
    %c0_6 = arith.constant 0 : index
    %c0_7 = arith.constant 0 : index
    %15 = vector.load %arg5[%c0_6, %c0_7] : memref<1x200xf32, #tpu.memory_space<vmem>>, vector<1x200xf32>
    %16 = vector.extract_strided_slice %14 {offsets = [0, 0], sizes = [4, 64], strides = [1, 1]} : vector<16x64xf32> to vector<4x64xf32>
    %c0_8 = arith.constant 0 : index
    %c0_9 = arith.constant 0 : index
    %17 = vector.load %arg4[%c0_8, %c0_9] : memref<256x200xf32, #tpu.memory_space<vmem>>, vector<64x200xf32>
    %cst_10 = arith.constant dense<0.000000e+00> : vector<4x200xf32>
    %18 = tpu.matmul %16, %17, %cst_10 {dimension_numbers = #tpu.dot_dimension_numbers<[1], [0], [0], [1], [0, 0, 1, 1], [], []>} : vector<4x64xf32>, vector<64x200xf32>, vector<4x200xf32> -> vector<4x200xf32>
    %19 = vector.broadcast %15 : vector<1x200xf32> to vector<4x200xf32>
    %20 = arith.addf %19, %18 : vector<4x200xf32>
    %21 = vector.extract_strided_slice %14 {offsets = [4, 0], sizes = [4, 64], strides = [1, 1]} : vector<16x64xf32> to vector<4x64xf32>
    %c64 = arith.constant 64 : index
    %c0_11 = arith.constant 0 : index
    %22 = vector.load %arg4[%c64, %c0_11] : memref<256x200xf32, #tpu.memory_space<vmem>>, vector<64x200xf32>
    %cst_12 = arith.constant dense<0.000000e+00> : vector<4x200xf32>
    %23 = tpu.matmul %21, %22, %cst_12 {dimension_numbers = #tpu.dot_dimension_numbers<[1], [0], [0], [1], [0, 0, 1, 1], [], []>} : vector<4x64xf32>, vector<64x200xf32>, vector<4x200xf32> -> vector<4x200xf32>
    %24 = arith.addf %20, %23 : vector<4x200xf32>
    %25 = vector.extract_strided_slice %14 {offsets = [8, 0], sizes = [4, 64], strides = [1, 1]} : vector<16x64xf32> to vector<4x64xf32>
    %c128 = arith.constant 128 : index
    %c0_13 = arith.constant 0 : index
    %26 = vector.load %arg4[%c128, %c0_13] : memref<256x200xf32, #tpu.memory_space<vmem>>, vector<64x200xf32>
    %cst_14 = arith.constant dense<0.000000e+00> : vector<4x200xf32>
    %27 = tpu.matmul %25, %26, %cst_14 {dimension_numbers = #tpu.dot_dimension_numbers<[1], [0], [0], [1], [0, 0, 1, 1], [], []>} : vector<4x64xf32>, vector<64x200xf32>, vector<4x200xf32> -> vector<4x200xf32>
    %28 = arith.addf %24, %27 : vector<4x200xf32>
    %29 = vector.extract_strided_slice %14 {offsets = [12, 0], sizes = [4, 64], strides = [1, 1]} : vector<16x64xf32> to vector<4x64xf32>
    %c192 = arith.constant 192 : index
    %c0_15 = arith.constant 0 : index
    %30 = vector.load %arg4[%c192, %c0_15] : memref<256x200xf32, #tpu.memory_space<vmem>>, vector<64x200xf32>
    %cst_16 = arith.constant dense<0.000000e+00> : vector<4x200xf32>
    %31 = tpu.matmul %29, %30, %cst_16 {dimension_numbers = #tpu.dot_dimension_numbers<[1], [0], [0], [1], [0, 0, 1, 1], [], []>} : vector<4x64xf32>, vector<64x200xf32>, vector<4x200xf32> -> vector<4x200xf32>
    %32 = arith.addf %28, %31 : vector<4x200xf32>
    %cst_17 = arith.constant 0.000000e+00 : f32
    %33 = vector.broadcast %cst_17 : f32 to vector<4x200xf32>
    %34 = arith.maximumf %32, %33 : vector<4x200xf32>
    %c0_18 = arith.constant 0 : index
    %c0_19 = arith.constant 0 : index
    %35 = vector.load %arg6[%c0_18, %c0_19] : memref<200x10xf32, #tpu.memory_space<vmem>>, vector<200x10xf32>
    %cst_20 = arith.constant dense<0.000000e+00> : vector<4x10xf32>
    %36 = tpu.matmul %34, %35, %cst_20 {dimension_numbers = #tpu.dot_dimension_numbers<[1], [0], [0], [1], [0, 0, 1, 1], [], []>} : vector<4x200xf32>, vector<200x10xf32>, vector<4x10xf32> -> vector<4x10xf32>
    %c0_21 = arith.constant 0 : index
    %c0_22 = arith.constant 0 : index
    %37 = vector.load %arg7[%c0_21, %c0_22] : memref<1x10xf32, #tpu.memory_space<vmem>>, vector<1x10xf32>
    %38 = vector.broadcast %37 : vector<1x10xf32> to vector<4x10xf32>
    %39 = arith.addf %36, %38 : vector<4x10xf32>
    %c0_23 = arith.constant 0 : index
    %c0_24 = arith.constant 0 : index
    %40 = vector.load %arg15[%c0_23, %c0_24] : memref<4x10xf32, #tpu.memory_space<vmem>>, vector<4x10xf32>
    tpu.vector_store %arg15[%c0_23, %c0_24], %39 {strides = array<i32>} : memref<4x10xf32, #tpu.memory_space<vmem>>, vector<4x10xf32>,
    %41 = vector.extract_strided_slice %39 {offsets = [0, 0], sizes = [2, 10], strides = [1, 1]} : vector<4x10xf32> to vector<2x10xf32>
    %42 = vector.extract_strided_slice %39 {offsets = [2, 0], sizes = [2, 10], strides = [1, 1]} : vector<4x10xf32> to vector<2x10xf32>
    %c0_25 = arith.constant 0 : index
    %c0_26 = arith.constant 0 : index
    %43 = vector.load %arg8[%c0_25, %c0_26] : memref<10x300xf32, #tpu.memory_space<vmem>>, vector<10x300xf32>
    %cst_27 = arith.constant dense<0.000000e+00> : vector<2x300xf32>
    %44 = tpu.matmul %41, %43, %cst_27 {dimension_numbers = #tpu.dot_dimension_numbers<[1], [0], [0], [1], [0, 0, 1, 1], [], []>} : vector<2x10xf32>, vector<10x300xf32>, vector<2x300xf32> -> vector<2x300xf32>
    %c0_28 = arith.constant 0 : index
    %c0_29 = arith.constant 0 : index
    %45 = vector.load %arg9[%c0_28, %c0_29] : memref<10x300xf32, #tpu.memory_space<vmem>>, vector<10x300xf32>
    %cst_30 = arith.constant dense<0.000000e+00> : vector<2x300xf32>
    %46 = tpu.matmul %42, %45, %cst_30 {dimension_numbers = #tpu.dot_dimension_numbers<[1], [0], [0], [1], [0, 0, 1, 1], [], []>} : vector<2x10xf32>, vector<10x300xf32>, vector<2x300xf32> -> vector<2x300xf32>
    %47 = arith.addf %44, %46 : vector<2x300xf32>
    %c0_31 = arith.constant 0 : index
    %c0_32 = arith.constant 0 : index
    %48 = vector.load %arg10[%c0_31, %c0_32] : memref<1x300xf32, #tpu.memory_space<vmem>>, vector<1x300xf32>
    %49 = vector.broadcast %48 : vector<1x300xf32> to vector<2x300xf32>
    %50 = arith.addf %47, %49 : vector<2x300xf32>
    %cst_33 = arith.constant 0.000000e+00 : f32
    %51 = vector.broadcast %cst_33 : f32 to vector<2x300xf32>
    %52 = arith.maximumf %50, %51 : vector<2x300xf32>
    %c0_34 = arith.constant 0 : index
    %c0_35 = arith.constant 0 : index
    %53 = vector.load %arg11[%c0_34, %c0_35] : memref<300x300xf32, #tpu.memory_space<vmem>>, vector<300x300xf32>
    %cst_36 = arith.constant dense<0.000000e+00> : vector<2x300xf32>
    %54 = tpu.matmul %52, %53, %cst_36 {dimension_numbers = #tpu.dot_dimension_numbers<[1], [0], [0], [1], [0, 0, 1, 1], [], []>} : vector<2x300xf32>, vector<300x300xf32>, vector<2x300xf32> -> vector<2x300xf32>
    %c0_37 = arith.constant 0 : index
    %c0_38 = arith.constant 0 : index
    %55 = vector.load %arg12[%c0_37, %c0_38] : memref<1x300xf32, #tpu.memory_space<vmem>>, vector<1x300xf32>
    %56 = vector.broadcast %55 : vector<1x300xf32> to vector<2x300xf32>
    %57 = arith.addf %54, %56 : vector<2x300xf32>
    %cst_39 = arith.constant 0.000000e+00 : f32
    %58 = vector.broadcast %cst_39 : f32 to vector<2x300xf32>
    %59 = arith.maximumf %57, %58 : vector<2x300xf32>
    %c0_40 = arith.constant 0 : index
    %c0_41 = arith.constant 0 : index
    %60 = vector.load %arg13[%c0_40, %c0_41] : memref<300x2xf32, #tpu.memory_space<vmem>>, vector<300x2xf32>
    %cst_42 = arith.constant dense<0.000000e+00> : vector<2x2xf32>
    %61 = tpu.matmul %59, %60, %cst_42 {dimension_numbers = #tpu.dot_dimension_numbers<[1], [0], [0], [1], [0, 0, 1, 1], [], []>} : vector<2x300xf32>, vector<300x2xf32>, vector<2x2xf32> -> vector<2x2xf32>
    %c0_43 = arith.constant 0 : index
    %c0_44 = arith.constant 0 : index
    %62 = vector.load %arg14[%c0_43, %c0_44] : memref<1x2xf32, #tpu.memory_space<vmem>>, vector<1x2xf32>
    %63 = vector.broadcast %62 : vector<1x2xf32> to vector<2x2xf32>
    %64 = arith.addf %61, %63 : vector<2x2xf32>
    %c0_45 = arith.constant 0 : index
    %c0_46 = arith.constant 0 : index
    %65 = vector.load %arg16[%c0_45, %c0_46] : memref<2x2xf32, #tpu.memory_space<vmem>>, vector<2x2xf32>
    tpu.vector_store %arg16[%c0_45, %c0_46], %64 {strides = array<i32>} : memref<2x2xf32, #tpu.memory_space<vmem>>, vector<2x2xf32>,
    return
  }
  func.func @transform_0(%arg0: i32) -> (i32, i32) {
    %c0_i32 = arith.constant 0 : i32
    %c0_i32_0 = arith.constant 0 : i32
    %c0_i32_1 = arith.constant 0 : i32
    return %c0_i32, %c0_i32_0 : i32, i32
  }
  func.func @transform_1(%arg0: i32) -> (i32, i32) {
    %c0_i32 = arith.constant 0 : i32
    %c0_i32_0 = arith.constant 0 : i32
    %c0_i32_1 = arith.constant 0 : i32
    return %c0_i32, %c0_i32_0 : i32, i32
  }
  func.func @transform_2(%arg0: i32) -> (i32, i32) {
    %c0_i32 = arith.constant 0 : i32
    %c0_i32_0 = arith.constant 0 : i32
    %c0_i32_1 = arith.constant 0 : i32
    return %c0_i32, %c0_i32_0 : i32, i32
  }
  func.func @transform_3(%arg0: i32) -> (i32, i32) {
    %c0_i32 = arith.constant 0 : i32
    %c0_i32_0 = arith.constant 0 : i32
    %c0_i32_1 = arith.constant 0 : i32
    return %c0_i32, %c0_i32_0 : i32, i32
  }
  func.func @transform_4(%arg0: i32) -> (i32, i32) {
    %c0_i32 = arith.constant 0 : i32
    %c0_i32_0 = arith.constant 0 : i32
    %c0_i32_1 = arith.constant 0 : i32
    return %c0_i32, %c0_i32_0 : i32, i32
  }
  func.func @transform_5(%arg0: i32) -> (i32, i32) {
    %c0_i32 = arith.constant 0 : i32
    %c0_i32_0 = arith.constant 0 : i32
    %c0_i32_1 = arith.constant 0 : i32
    return %c0_i32, %c0_i32_0 : i32, i32
  }
  func.func @transform_6(%arg0: i32) -> (i32, i32) {
    %c0_i32 = arith.constant 0 : i32
    %c0_i32_0 = arith.constant 0 : i32
    %c0_i32_1 = arith.constant 0 : i32
    return %c0_i32, %c0_i32_0 : i32, i32
  }
  func.func @transform_7(%arg0: i32) -> (i32, i32) {
    %c0_i32 = arith.constant 0 : i32
    %c0_i32_0 = arith.constant 0 : i32
    %c0_i32_1 = arith.constant 0 : i32
    return %c0_i32, %c0_i32_0 : i32, i32
  }
  func.func @transform_8(%arg0: i32) -> (i32, i32) {
    %c0_i32 = arith.constant 0 : i32
    %c0_i32_0 = arith.constant 0 : i32
    %c0_i32_1 = arith.constant 0 : i32
    return %c0_i32, %c0_i32_0 : i32, i32
  }
  func.func @transform_9(%arg0: i32) -> (i32, i32) {
    %c0_i32 = arith.constant 0 : i32
    %c0_i32_0 = arith.constant 0 : i32
    %c0_i32_1 = arith.constant 0 : i32
    return %c0_i32, %c0_i32_0 : i32, i32
  }
  func.func @transform_10(%arg0: i32) -> (i32, i32) {
    %c0_i32 = arith.constant 0 : i32
    %c0_i32_0 = arith.constant 0 : i32
    %c0_i32_1 = arith.constant 0 : i32
    return %c0_i32, %c0_i32_0 : i32, i32
  }
  func.func @transform_11(%arg0: i32) -> (i32, i32) {
    %c0_i32 = arith.constant 0 : i32
    %c0_i32_0 = arith.constant 0 : i32
    %c0_i32_1 = arith.constant 0 : i32
    return %c0_i32, %c0_i32_0 : i32, i32
  }
  func.func @transform_12(%arg0: i32) -> (i32, i32) {
    %c0_i32 = arith.constant 0 : i32
    %c0_i32_0 = arith.constant 0 : i32
    %c0_i32_1 = arith.constant 0 : i32
    return %c0_i32, %c0_i32_0 : i32, i32
  }
  func.func @transform_13(%arg0: i32) -> (i32, i32) {
    %c0_i32 = arith.constant 0 : i32
    %c0_i32_0 = arith.constant 0 : i32
    %c0_i32_1 = arith.constant 0 : i32
    return %c0_i32, %c0_i32_0 : i32, i32
  }
  func.func @transform_14(%arg0: i32) -> (i32, i32) {
    %c0_i32 = arith.constant 0 : i32
    %c0_i32_0 = arith.constant 0 : i32
    %c0_i32_1 = arith.constant 0 : i32
    return %c0_i32, %c0_i32_0 : i32, i32
  }
  func.func @transform_15(%arg0: i32) -> (i32, i32) {
    %c0_i32 = arith.constant 0 : i32
    %c0_i32_0 = arith.constant 0 : i32
    %c0_i32_1 = arith.constant 0 : i32
    return %c0_i32, %c0_i32_0 : i32, i32
  }
}

</mosaic_0001>

<llo_original>
// kernel: forward.2
$region0: #{forward.2}
  #allocation0 [shape = 'u32[]', space=smem, size = 0x4, offset = 0x4, fixed_abs, tag = 'smem constant byte address 0x4 - core index']
  #allocation1 [shape = 'u32[144,128]{1,0:T(1,128)}', space=vmem, size = 0x12000, scoped, tag = 'internal scratch']
  %s0 = inlined_call_operand.vmem [shape: f32[576,9], index: 0, kind: input, shape index: {}]
  %s1 = inlined_call_operand.vmem [shape: f32[9,32], index: 1, kind: input, shape index: {}]
  %s2 = inlined_call_operand.vmem [shape: f32[1,32], index: 2, kind: input, shape index: {}]
  %s3 = inlined_call_operand.vmem [shape: f32[144,32], index: 3, kind: output, shape index: {}]
  %s4 = sld [smem:[#allocation0]]
  $region22: #{forward.2} parent=0
    _
  %s6 = ssub.s32 1, %s4
  %s7 = scalar_select 0, %s6, %s4
  // Predicated region
  $region2: #{forward.2} parent=0 // pred_check
    _
  $region3: #{forward.2} parent=0 // pred_check_branch
    %9 = sbr.rel (0) target = $region5
  $region4: #{forward.2} parent=0 // pred_region
    _
  $region5: #{forward.2} parent=0 // pred_fallthru
    _
  // Predicated region
  $region6: #{forward.2} parent=0 // pred_check
    _
  $region7: #{forward.2} parent=0 // pred_check_branch
    %11 = sbr.rel (0) target = $region9
  $region8: #{forward.2} parent=0 // pred_region
    _
  $region9: #{forward.2} parent=0 // pred_fallthru
    _
  // Predicated region
  $region10: #{forward.2} parent=0 // pred_check
    _
  $region11: #{forward.2} parent=0 // pred_check_branch
    %13 = sbr.rel (0) target = $region13
  $region12: #{forward.2} parent=0 // pred_region
    _
  $region13: #{forward.2} parent=0 // pred_fallthru
    _
  %v14 = vld [vmem:[%s0] sm:$0xff]
  %v15 = vld [vmem:[%s0 + $0x8] sm:$0xff]
  %v16 = vld [vmem:[%s0 + $0x10] sm:$0xff]
  %v17 = vld [vmem:[%s0 + $0x18] sm:$0xff]
  %v18 = vld [vmem:[%s0 + $0x20] sm:$0xff]
  %v19 = vld [vmem:[%s0 + $0x28] sm:$0xff]
  %v20 = vld [vmem:[%s0 + $0x30] sm:$0xff]
  %v21 = vld [vmem:[%s0 + $0x38] sm:$0xff]
  %v22 = vld [vmem:[%s0 + $0x40] sm:$0xff]
  %v23 = vld [vmem:[%s0 + $0x48] sm:$0xff]
  %v24 = vld [vmem:[%s0 + $0x50] sm:$0xff]
  %v25 = vld [vmem:[%s0 + $0x58] sm:$0xff]
  %v26 = vld [vmem:[%s0 + $0x60] sm:$0xff]
  %v27 = vld [vmem:[%s0 + $0x68] sm:$0xff]
  %v28 = vld [vmem:[%s0 + $0x70] sm:$0xff]
  %v29 = vld [vmem:[%s0 + $0x78] sm:$0xff]
  %v30 = vld [vmem:[%s0 + $0x80] sm:$0xff]
  %v31 = vld [vmem:[%s0 + $0x88] sm:$0xff]
  %v32 = vld [vmem:[%s0 + $0x90] sm:$0xff]
  %v33 = vld [vmem:[%s0 + $0x98] sm:$0xff]
  %v34 = vld [vmem:[%s0 + $0xa0] sm:$0xff]
  %v35 = vld [vmem:[%s0 + $0xa8] sm:$0xff]
  %v36 = vld [vmem:[%s0 + $0xb0] sm:$0xff]
  %v37 = vld [vmem:[%s0 + $0xb8] sm:$0xff]
  %v38 = vld [vmem:[%s0 + $0xc0] sm:$0xff]
  %v39 = vld [vmem:[%s0 + $0xc8] sm:$0xff]
  %v40 = vld [vmem:[%s0 + $0xd0] sm:$0xff]
  %v41 = vld [vmem:[%s0 + $0xd8] sm:$0xff]
  %v42 = vld [vmem:[%s0 + $0xe0] sm:$0xff]
  %v43 = vld [vmem:[%s0 + $0xe8] sm:$0xff]
  %v44 = vld [vmem:[%s0 + $0xf0] sm:$0xff]
  %v45 = vld [vmem:[%s0 + $0xf8] sm:$0xff]
  %v46 = vld [vmem:[%s0 + $0x100] sm:$0xff]
  %v47 = vld [vmem:[%s0 + $0x108] sm:$0xff]
  %v48 = vld [vmem:[%s0 + $0x110] sm:$0xff]
  %v49 = vld [vmem:[%s0 + $0x118] sm:$0xff]
  %v50 = vld [vmem:[%s0 + $0x120] sm:$0xff]
  %v51 = vld [vmem:[%s0 + $0x128] sm:$0xff]
  %v52 = vld [vmem:[%s0 + $0x130] sm:$0xff]
  %v53 = vld [vmem:[%s0 + $0x138] sm:$0xff]
  %v54 = vld [vmem:[%s0 + $0x140] sm:$0xff]
  %v55 = vld [vmem:[%s0 + $0x148] sm:$0xff]
  %v56 = vld [vmem:[%s0 + $0x150] sm:$0xff]
  %v57 = vld [vmem:[%s0 + $0x158] sm:$0xff]
  %v58 = vld [vmem:[%s0 + $0x160] sm:$0xff]
  %v59 = vld [vmem:[%s0 + $0x168] sm:$0xff]
  %v60 = vld [vmem:[%s0 + $0x170] sm:$0xff]
  %v61 = vld [vmem:[%s0 + $0x178] sm:$0xff]
  %v62 = vld [vmem:[%s0 + $0x180] sm:$0xff]
  %v63 = vld [vmem:[%s0 + $0x188] sm:$0xff]
  %v64 = vld [vmem:[%s0 + $0x190] sm:$0xff]
  %v65 = vld [vmem:[%s0 + $0x198] sm:$0xff]
  %v66 = vld [vmem:[%s0 + $0x1a0] sm:$0xff]
  %v67 = vld [vmem:[%s0 + $0x1a8] sm:$0xff]
  %v68 = vld [vmem:[%s0 + $0x1b0] sm:$0xff]
  %v69 = vld [vmem:[%s0 + $0x1b8] sm:$0xff]
  %v70 = vld [vmem:[%s0 + $0x1c0] sm:$0xff]
  %v71 = vld [vmem:[%s0 + $0x1c8] sm:$0xff]
  %v72 = vld [vmem:[%s0 + $0x1d0] sm:$0xff]
  %v73 = vld [vmem:[%s0 + $0x1d8] sm:$0xff]
  %v74 = vld [vmem:[%s0 + $0x1e0] sm:$0xff]
  %v75 = vld [vmem:[%s0 + $0x1e8] sm:$0xff]
  %v76 = vld [vmem:[%s0 + $0x1f0] sm:$0xff]
  %v77 = vld [vmem:[%s0 + $0x1f8] sm:$0xff]
  %v78 = vld [vmem:[%s0 + $0x200] sm:$0xff]
  %v79 = vld [vmem:[%s0 + $0x208] sm:$0xff]
  %v80 = vld [vmem:[%s0 + $0x210] sm:$0xff]
  %v81 = vld [vmem:[%s0 + $0x218] sm:$0xff]
  %v82 = vld [vmem:[%s0 + $0x220] sm:$0xff]
  %v83 = vld [vmem:[%s0 + $0x228] sm:$0xff]
  %v84 = vld [vmem:[%s0 + $0x230] sm:$0xff]
  %v85 = vld [vmem:[%s0 + $0x238] sm:$0xff]
  %v86 = vld [vmem:[%s1] sm:$0xff]
  %v87 = vld [vmem:[%s1 + $0x8] sm:$0x1]
  %v88 = vld [vmem:[%s2] sm:$0x1]
  %v90 = vlaneseq
  %v91 = vshrl.u32 %v90, 7
  %v92 = vsub.s32 0, %v91
  %v93 = vrot.slane %v88, %v92
  %vm95 = vcmask 72704
  %v97 = vsel %vm95, %v14, 0
  %v100 = vsel %vm95, %v15, 0
  %v103 = vsel %vm95, %v16, 0
  %v106 = vsel %vm95, %v17, 0
  %v109 = vsel %vm95, %v18, 0
  %v112 = vsel %vm95, %v19, 0
  %v115 = vsel %vm95, %v20, 0
  %v118 = vsel %vm95, %v21, 0
  %v121 = vsel %vm95, %v22, 0
  %v124 = vsel %vm95, %v23, 0
  %v127 = vsel %vm95, %v24, 0
  %v130 = vsel %vm95, %v25, 0
  %v133 = vsel %vm95, %v26, 0
  %v136 = vsel %vm95, %v27, 0
  %v139 = vsel %vm95, %v28, 0
  %v142 = vsel %vm95, %v29, 0
  %v145 = vsel %vm95, %v30, 0
  %v148 = vsel %vm95, %v31, 0
  %v151 = vsel %vm95, %v32, 0
  %v154 = vsel %vm95, %v33, 0
  %v157 = vsel %vm95, %v34, 0
  %v160 = vsel %vm95, %v35, 0
  %v163 = vsel %vm95, %v36, 0
  %v166 = vsel %vm95, %v37, 0
  %v169 = vsel %vm95, %v38, 0
  %v172 = vsel %vm95, %v39, 0
  %v175 = vsel %vm95, %v40, 0
  %v178 = vsel %vm95, %v41, 0
  %v181 = vsel %vm95, %v42, 0
  %v184 = vsel %vm95, %v43, 0
  %v187 = vsel %vm95, %v44, 0
  %v190 = vsel %vm95, %v45, 0
  %v193 = vsel %vm95, %v46, 0
  %v196 = vsel %vm95, %v47, 0
  %v199 = vsel %vm95, %v48, 0
  %v202 = vsel %vm95, %v49, 0
  %v205 = vsel %vm95, %v50, 0
  %v208 = vsel %vm95, %v51, 0
  %v211 = vsel %vm95, %v52, 0
  %v214 = vsel %vm95, %v53, 0
  %v217 = vsel %vm95, %v54, 0
  %v220 = vsel %vm95, %v55, 0
  %v223 = vsel %vm95, %v56, 0
  %v226 = vsel %vm95, %v57, 0
  %v229 = vsel %vm95, %v58, 0
  %v232 = vsel %vm95, %v59, 0
  %v235 = vsel %vm95, %v60, 0
  %v238 = vsel %vm95, %v61, 0
  %v241 = vsel %vm95, %v62, 0
  %v244 = vsel %vm95, %v63, 0
  %v247 = vsel %vm95, %v64, 0
  %v250 = vsel %vm95, %v65, 0
  %v253 = vsel %vm95, %v66, 0
  %v256 = vsel %vm95, %v67, 0
  %v259 = vsel %vm95, %v68, 0
  %v262 = vsel %vm95, %v69, 0
  %v265 = vsel %vm95, %v70, 0
  %v268 = vsel %vm95, %v71, 0
  %v271 = vsel %vm95, %v72, 0
  %v274 = vsel %vm95, %v73, 0
  %v277 = vsel %vm95, %v74, 0
  %v280 = vsel %vm95, %v75, 0
  %v283 = vsel %vm95, %v76, 0
  %v286 = vsel %vm95, %v77, 0
  %v289 = vsel %vm95, %v78, 0
  %v292 = vsel %vm95, %v79, 0
  %v295 = vsel %vm95, %v80, 0
  %v298 = vsel %vm95, %v81, 0
  %v301 = vsel %vm95, %v82, 0
  %v304 = vsel %vm95, %v83, 0
  %v307 = vsel %vm95, %v84, 0
  %v310 = vsel %vm95, %v85, 0
  %vm312 = vcmask 1040384
  %v314 = vsel %vm312, %v87, 0
  %316 = vmatprep.subr.mxu0 0.0
  %317 = vmatpush1.msra.mxu0 0.0
  %318 = vmatprep.subr.mxu0 0.0
  %319 = vmatpush1.msra.mxu0 0.0
  %320 = vmatprep.subr.mxu0 0.0
  %321 = vmatpush1.msra.mxu0 0.0
  %322 = vmatprep.subr.mxu0 0.0
  %323 = vmatpush1.msra.mxu0 0.0
  %324 = vmatprep.subr.mxu0 0.0
  %325 = vmatpush1.msra.mxu0 0.0
  %326 = vmatprep.subr.mxu0 0.0
  %327 = vmatpush1.msra.mxu0 0.0
  %328 = vmatprep.subr.mxu0 0.0
  %329 = vmatpush1.msra.mxu0 0.0
  %330 = vmatprep.subr.mxu0 0.0
  %331 = vmatpush1.msra.mxu0 0.0
  %332 = vmatprep.subr.mxu0 0.0
  %333 = vmatpush1.msra.mxu0 0.0
  %334 = vmatprep.subr.mxu0 0.0
  %335 = vmatpush1.msra.mxu0 0.0
  %336 = vmatprep.subr.mxu0 0.0
  %337 = vmatpush1.msra.mxu0 0.0
  %338 = vmatprep.subr.mxu0 0.0
  %339 = vmatpush1.msra.mxu0 0.0
  %340 = vmatprep.subr.mxu0 0.0
  %341 = vmatpush1.msra.mxu0 0.0
  %342 = vmatprep.subr.mxu0 0.0
  %343 = vmatpush1.msra.mxu0 0.0
  %344 = vmatprep.subr.mxu0 0.0
  %345 = vmatpush1.msra.mxu0 %v314
  %346 = vmatprep.subr.mxu0 0.0
  %347 = vmatpush1.msra.mxu0 %v86
  %348 = vmatprep.subr.mxu0 0.0
  %349 = vmatpush2.msra.mxu0 0.0
  %350 = vmatprep.subr.mxu0 0.0
  %351 = vmatpush2.msra.mxu0 0.0
  %352 = vmatprep.subr.mxu0 0.0
  %353 = vmatpush2.msra.mxu0 0.0
  %354 = vmatprep.subr.mxu0 0.0
  %355 = vmatpush2.msra.mxu0 0.0
  %356 = vmatprep.subr.mxu0 0.0
  %357 = vmatpush2.msra.mxu0 0.0
  %358 = vmatprep.subr.mxu0 0.0
  %359 = vmatpush2.msra.mxu0 0.0
  %360 = vmatprep.subr.mxu0 0.0
  %361 = vmatpush2.msra.mxu0 0.0
  %362 = vmatprep.subr.mxu0 0.0
  %363 = vmatpush2.msra.mxu0 0.0
  %364 = vmatprep.subr.mxu0 0.0
  %365 = vmatpush2.msra.mxu0 0.0
  %366 = vmatprep.subr.mxu0 0.0
  %367 = vmatpush2.msra.mxu0 0.0
  %368 = vmatprep.subr.mxu0 0.0
  %369 = vmatpush2.msra.mxu0 0.0
  %370 = vmatprep.subr.mxu0 0.0
  %371 = vmatpush2.msra.mxu0 0.0
  %372 = vmatprep.subr.mxu0 0.0
  %373 = vmatpush2.msra.mxu0 0.0
  %374 = vmatprep.subr.mxu0 0.0
  %375 = vmatpush2.msra.mxu0 0.0
  %376 = vmatprep.subr.mxu0 0.0
  %377 = vmatpush2.msra.mxu0 0.0
  %378 = vmatprep.subr.mxu0 0.0
  %379 = vmatpush2.msra.mxu0 0.0
  %380 = vmatprep.mubr.f32.mxu0 0.0
  %381 = vmatmul.mubr.f32.gmra.mxu0 %v97
  %v382 = vpop.f32.mrf.mxu0
  %v383 = vadd.f32 %v93, %v382
  %v384 = vpop.f32.mrf.mxu0
  %385 = vmatprep.mubr.f32.mxu0 0.0
  %386 = vmatmul.mubr.f32.gmra.mxu0 %v100
  %v387 = vpop.f32.mrf.mxu0
  %v388 = vadd.f32 %v93, %v387
  %v389 = vpop.f32.mrf.mxu0
  %390 = vmatprep.mubr.f32.mxu0 0.0
  %391 = vmatmul.mubr.f32.gmra.mxu0 %v103
  %v392 = vpop.f32.mrf.mxu0
  %v393 = vadd.f32 %v93, %v392
  %v394 = vpop.f32.mrf.mxu0
  %395 = vmatprep.mubr.f32.mxu0 0.0
  %396 = vmatmul.mubr.f32.gmra.mxu0 %v106
  %v397 = vpop.f32.mrf.mxu0
  %v398 = vadd.f32 %v93, %v397
  %v399 = vpop.f32.mrf.mxu0
  %400 = vmatprep.mubr.f32.mxu0 0.0
  %401 = vmatmul.mubr.f32.gmra.mxu0 %v109
  %v402 = vpop.f32.mrf.mxu0
  %v403 = vadd.f32 %v93, %v402
  %v404 = vpop.f32.mrf.mxu0
  %405 = vmatprep.mubr.f32.mxu0 0.0
  %406 = vmatmul.mubr.f32.gmra.mxu0 %v112
  %v407 = vpop.f32.mrf.mxu0
  %v408 = vadd.f32 %v93, %v407
  %v409 = vpop.f32.mrf.mxu0
  %410 = vmatprep.mubr.f32.mxu0 0.0
  %411 = vmatmul.mubr.f32.gmra.mxu0 %v115
  %v412 = vpop.f32.mrf.mxu0
  %v413 = vadd.f32 %v93, %v412
  %v414 = vpop.f32.mrf.mxu0
  %415 = vmatprep.mubr.f32.mxu0 0.0
  %416 = vmatmul.mubr.f32.gmra.mxu0 %v118
  %v417 = vpop.f32.mrf.mxu0
  %v418 = vadd.f32 %v93, %v417
  %v419 = vpop.f32.mrf.mxu0
  %420 = vmatprep.mubr.f32.mxu0 0.0
  %421 = vmatmul.mubr.f32.gmra.mxu0 %v121
  %v422 = vpop.f32.mrf.mxu0
  %v423 = vadd.f32 %v93, %v422
  %v424 = vpop.f32.mrf.mxu0
  %425 = vmatprep.mubr.f32.mxu0 0.0
  %426 = vmatmul.mubr.f32.gmra.mxu0 %v124
  %v427 = vpop.f32.mrf.mxu0
  %v428 = vadd.f32 %v93, %v427
  %v429 = vpop.f32.mrf.mxu0
  %430 = vmatprep.mubr.f32.mxu0 0.0
  %431 = vmatmul.mubr.f32.gmra.mxu0 %v127
  %v432 = vpop.f32.mrf.mxu0
  %v433 = vadd.f32 %v93, %v432
  %v434 = vpop.f32.mrf.mxu0
  %435 = vmatprep.mubr.f32.mxu0 0.0
  %436 = vmatmul.mubr.f32.gmra.mxu0 %v130
  %v437 = vpop.f32.mrf.mxu0
  %v438 = vadd.f32 %v93, %v437
  %v439 = vpop.f32.mrf.mxu0
  %440 = vmatprep.mubr.f32.mxu0 0.0
  %441 = vmatmul.mubr.f32.gmra.mxu0 %v133
  %v442 = vpop.f32.mrf.mxu0
  %v443 = vadd.f32 %v93, %v442
  %v444 = vpop.f32.mrf.mxu0
  %445 = vmatprep.mubr.f32.mxu0 0.0
  %446 = vmatmul.mubr.f32.gmra.mxu0 %v136
  %v447 = vpop.f32.mrf.mxu0
  %v448 = vadd.f32 %v93, %v447
  %v449 = vpop.f32.mrf.mxu0
  %450 = vmatprep.mubr.f32.mxu0 0.0
  %451 = vmatmul.mubr.f32.gmra.mxu0 %v139
  %v452 = vpop.f32.mrf.mxu0
  %v453 = vadd.f32 %v93, %v452
  %v454 = vpop.f32.mrf.mxu0
  %455 = vmatprep.mubr.f32.mxu0 0.0
  %456 = vmatmul.mubr.f32.gmra.mxu0 %v142
  %v457 = vpop.f32.mrf.mxu0
  %v458 = vadd.f32 %v93, %v457
  %v459 = vpop.f32.mrf.mxu0
  %460 = vmatprep.mubr.f32.mxu0 0.0
  %461 = vmatmul.mubr.f32.gmra.mxu0 %v145
  %v462 = vpop.f32.mrf.mxu0
  %v463 = vadd.f32 %v93, %v462
  %v464 = vpop.f32.mrf.mxu0
  %465 = vmatprep.mubr.f32.mxu0 0.0
  %466 = vmatmul.mubr.f32.gmra.mxu0 %v148
  %v467 = vpop.f32.mrf.mxu0
  %v468 = vadd.f32 %v93, %v467
  %v469 = vpop.f32.mrf.mxu0
  %470 = vmatprep.mubr.f32.mxu0 0.0
  %471 = vmatmul.mubr.f32.gmra.mxu0 %v151
  %v472 = vpop.f32.mrf.mxu0
  %v473 = vadd.f32 %v93, %v472
  %v474 = vpop.f32.mrf.mxu0
  %475 = vmatprep.mubr.f32.mxu0 0.0
  %476 = vmatmul.mubr.f32.gmra.mxu0 %v154
  %v477 = vpop.f32.mrf.mxu0
  %v478 = vadd.f32 %v93, %v477
  %v479 = vpop.f32.mrf.mxu0
  %480 = vmatprep.mubr.f32.mxu0 0.0
  %481 = vmatmul.mubr.f32.gmra.mxu0 %v157
  %v482 = vpop.f32.mrf.mxu0
  %v483 = vadd.f32 %v93, %v482
  %v484 = vpop.f32.mrf.mxu0
  %485 = vmatprep.mubr.f32.mxu0 0.0
  %486 = vmatmul.mubr.f32.gmra.mxu0 %v160
  %v487 = vpop.f32.mrf.mxu0
  %v488 = vadd.f32 %v93, %v487
  %v489 = vpop.f32.mrf.mxu0
  %490 = vmatprep.mubr.f32.mxu0 0.0
  %491 = vmatmul.mubr.f32.gmra.mxu0 %v163
  %v492 = vpop.f32.mrf.mxu0
  %v493 = vadd.f32 %v93, %v492
  %v494 = vpop.f32.mrf.mxu0
  %495 = vmatprep.mubr.f32.mxu0 0.0
  %496 = vmatmul.mubr.f32.gmra.mxu0 %v166
  %v497 = vpop.f32.mrf.mxu0
  %v498 = vadd.f32 %v93, %v497
  %v499 = vpop.f32.mrf.mxu0
  %500 = vmatprep.mubr.f32.mxu0 0.0
  %501 = vmatmul.mubr.f32.gmra.mxu0 %v169
  %v502 = vpop.f32.mrf.mxu0
  %v503 = vadd.f32 %v93, %v502
  %v504 = vpop.f32.mrf.mxu0
  %505 = vmatprep.mubr.f32.mxu0 0.0
  %506 = vmatmul.mubr.f32.gmra.mxu0 %v172
  %v507 = vpop.f32.mrf.mxu0
  %v508 = vadd.f32 %v93, %v507
  %v509 = vpop.f32.mrf.mxu0
  %510 = vmatprep.mubr.f32.mxu0 0.0
  %511 = vmatmul.mubr.f32.gmra.mxu0 %v175
  %v512 = vpop.f32.mrf.mxu0
  %v513 = vadd.f32 %v93, %v512
  %v514 = vpop.f32.mrf.mxu0
  %515 = vmatprep.mubr.f32.mxu0 0.0
  %516 = vmatmul.mubr.f32.gmra.mxu0 %v178
  %v517 = vpop.f32.mrf.mxu0
  %v518 = vadd.f32 %v93, %v517
  %v519 = vpop.f32.mrf.mxu0
  %520 = vmatprep.mubr.f32.mxu0 0.0
  %521 = vmatmul.mubr.f32.gmra.mxu0 %v181
  %v522 = vpop.f32.mrf.mxu0
  %v523 = vadd.f32 %v93, %v522
  %v524 = vpop.f32.mrf.mxu0
  %525 = vmatprep.mubr.f32.mxu0 0.0
  %526 = vmatmul.mubr.f32.gmra.mxu0 %v184
  %v527 = vpop.f32.mrf.mxu0
  %v528 = vadd.f32 %v93, %v527
  %v529 = vpop.f32.mrf.mxu0
  %530 = vmatprep.mubr.f32.mxu0 0.0
  %531 = vmatmul.mubr.f32.gmra.mxu0 %v187
  %v532 = vpop.f32.mrf.mxu0
  %v533 = vadd.f32 %v93, %v532
  %v534 = vpop.f32.mrf.mxu0
  %535 = vmatprep.mubr.f32.mxu0 0.0
  %536 = vmatmul.mubr.f32.gmra.mxu0 %v190
  %v537 = vpop.f32.mrf.mxu0
  %v538 = vadd.f32 %v93, %v537
  %v539 = vpop.f32.mrf.mxu0
  %540 = vmatprep.mubr.f32.mxu0 0.0
  %541 = vmatmul.mubr.f32.gmra.mxu0 %v193
  %v542 = vpop.f32.mrf.mxu0
  %v543 = vadd.f32 %v93, %v542
  %v544 = vpop.f32.mrf.mxu0
  %545 = vmatprep.mubr.f32.mxu0 0.0
  %546 = vmatmul.mubr.f32.gmra.mxu0 %v196
  %v547 = vpop.f32.mrf.mxu0
  %v548 = vadd.f32 %v93, %v547
  %v549 = vpop.f32.mrf.mxu0
  %550 = vmatprep.mubr.f32.mxu0 0.0
  %551 = vmatmul.mubr.f32.gmra.mxu0 %v199
  %v552 = vpop.f32.mrf.mxu0
  %v553 = vadd.f32 %v93, %v552
  %v554 = vpop.f32.mrf.mxu0
  %555 = vmatprep.mubr.f32.mxu0 0.0
  %556 = vmatmul.mubr.f32.gmra.mxu0 %v202
  %v557 = vpop.f32.mrf.mxu0
  %v558 = vadd.f32 %v93, %v557
  %v559 = vpop.f32.mrf.mxu0
  %560 = vmatprep.mubr.f32.mxu0 0.0
  %561 = vmatmul.mubr.f32.gmra.mxu0 %v205
  %v562 = vpop.f32.mrf.mxu0
  %v563 = vadd.f32 %v93, %v562
  %v564 = vpop.f32.mrf.mxu0
  %565 = vmatprep.mubr.f32.mxu0 0.0
  %566 = vmatmul.mubr.f32.gmra.mxu0 %v208
  %v567 = vpop.f32.mrf.mxu0
  %v568 = vadd.f32 %v93, %v567
  %v569 = vpop.f32.mrf.mxu0
  %570 = vmatprep.mubr.f32.mxu0 0.0
  %571 = vmatmul.mubr.f32.gmra.mxu0 %v211
  %v572 = vpop.f32.mrf.mxu0
  %v573 = vadd.f32 %v93, %v572
  %v574 = vpop.f32.mrf.mxu0
  %575 = vmatprep.mubr.f32.mxu0 0.0
  %576 = vmatmul.mubr.f32.gmra.mxu0 %v214
  %v577 = vpop.f32.mrf.mxu0
  %v578 = vadd.f32 %v93, %v577
  %v579 = vpop.f32.mrf.mxu0
  %580 = vmatprep.mubr.f32.mxu0 0.0
  %581 = vmatmul.mubr.f32.gmra.mxu0 %v217
  %v582 = vpop.f32.mrf.mxu0
  %v583 = vadd.f32 %v93, %v582
  %v584 = vpop.f32.mrf.mxu0
  %585 = vmatprep.mubr.f32.mxu0 0.0
  %586 = vmatmul.mubr.f32.gmra.mxu0 %v220
  %v587 = vpop.f32.mrf.mxu0
  %v588 = vadd.f32 %v93, %v587
  %v589 = vpop.f32.mrf.mxu0
  %590 = vmatprep.mubr.f32.mxu0 0.0
  %591 = vmatmul.mubr.f32.gmra.mxu0 %v223
  %v592 = vpop.f32.mrf.mxu0
  %v593 = vadd.f32 %v93, %v592
  %v594 = vpop.f32.mrf.mxu0
  %595 = vmatprep.mubr.f32.mxu0 0.0
  %596 = vmatmul.mubr.f32.gmra.mxu0 %v226
  %v597 = vpop.f32.mrf.mxu0
  %v598 = vadd.f32 %v93, %v597
  %v599 = vpop.f32.mrf.mxu0
  %600 = vmatprep.mubr.f32.mxu0 0.0
  %601 = vmatmul.mubr.f32.gmra.mxu0 %v229
  %v602 = vpop.f32.mrf.mxu0
  %v603 = vadd.f32 %v93, %v602
  %v604 = vpop.f32.mrf.mxu0
  %605 = vmatprep.mubr.f32.mxu0 0.0
  %606 = vmatmul.mubr.f32.gmra.mxu0 %v232
  %v607 = vpop.f32.mrf.mxu0
  %v608 = vadd.f32 %v93, %v607
  %v609 = vpop.f32.mrf.mxu0
  %610 = vmatprep.mubr.f32.mxu0 0.0
  %611 = vmatmul.mubr.f32.gmra.mxu0 %v235
  %v612 = vpop.f32.mrf.mxu0
  %v613 = vadd.f32 %v93, %v612
  %v614 = vpop.f32.mrf.mxu0
  %615 = vmatprep.mubr.f32.mxu0 0.0
  %616 = vmatmul.mubr.f32.gmra.mxu0 %v238
  %v617 = vpop.f32.mrf.mxu0
  %v618 = vadd.f32 %v93, %v617
  %v619 = vpop.f32.mrf.mxu0
  %620 = vmatprep.mubr.f32.mxu0 0.0
  %621 = vmatmul.mubr.f32.gmra.mxu0 %v241
  %v622 = vpop.f32.mrf.mxu0
  %v623 = vadd.f32 %v93, %v622
  %v624 = vpop.f32.mrf.mxu0
  %625 = vmatprep.mubr.f32.mxu0 0.0
  %626 = vmatmul.mubr.f32.gmra.mxu0 %v244
  %v627 = vpop.f32.mrf.mxu0
  %v628 = vadd.f32 %v93, %v627
  %v629 = vpop.f32.mrf.mxu0
  %630 = vmatprep.mubr.f32.mxu0 0.0
  %631 = vmatmul.mubr.f32.gmra.mxu0 %v247
  %v632 = vpop.f32.mrf.mxu0
  %v633 = vadd.f32 %v93, %v632
  %v634 = vpop.f32.mrf.mxu0
  %635 = vmatprep.mubr.f32.mxu0 0.0
  %636 = vmatmul.mubr.f32.gmra.mxu0 %v250
  %v637 = vpop.f32.mrf.mxu0
  %v638 = vadd.f32 %v93, %v637
  %v639 = vpop.f32.mrf.mxu0
  %640 = vmatprep.mubr.f32.mxu0 0.0
  %641 = vmatmul.mubr.f32.gmra.mxu0 %v253
  %v642 = vpop.f32.mrf.mxu0
  %v643 = vadd.f32 %v93, %v642
  %v644 = vpop.f32.mrf.mxu0
  %645 = vmatprep.mubr.f32.mxu0 0.0
  %646 = vmatmul.mubr.f32.gmra.mxu0 %v256
  %v647 = vpop.f32.mrf.mxu0
  %v648 = vadd.f32 %v93, %v647
  %v649 = vpop.f32.mrf.mxu0
  %650 = vmatprep.mubr.f32.mxu0 0.0
  %651 = vmatmul.mubr.f32.gmra.mxu0 %v259
  %v652 = vpop.f32.mrf.mxu0
  %v653 = vadd.f32 %v93, %v652
  %v654 = vpop.f32.mrf.mxu0
  %655 = vmatprep.mubr.f32.mxu0 0.0
  %656 = vmatmul.mubr.f32.gmra.mxu0 %v262
  %v657 = vpop.f32.mrf.mxu0
  %v658 = vadd.f32 %v93, %v657
  %v659 = vpop.f32.mrf.mxu0
  %660 = vmatprep.mubr.f32.mxu0 0.0
  %661 = vmatmul.mubr.f32.gmra.mxu0 %v265
  %v662 = vpop.f32.mrf.mxu0
  %v663 = vadd.f32 %v93, %v662
  %v664 = vpop.f32.mrf.mxu0
  %665 = vmatprep.mubr.f32.mxu0 0.0
  %666 = vmatmul.mubr.f32.gmra.mxu0 %v268
  %v667 = vpop.f32.mrf.mxu0
  %v668 = vadd.f32 %v93, %v667
  %v669 = vpop.f32.mrf.mxu0
  %670 = vmatprep.mubr.f32.mxu0 0.0
  %671 = vmatmul.mubr.f32.gmra.mxu0 %v271
  %v672 = vpop.f32.mrf.mxu0
  %v673 = vadd.f32 %v93, %v672
  %v674 = vpop.f32.mrf.mxu0
  %675 = vmatprep.mubr.f32.mxu0 0.0
  %676 = vmatmul.mubr.f32.gmra.mxu0 %v274
  %v677 = vpop.f32.mrf.mxu0
  %v678 = vadd.f32 %v93, %v677
  %v679 = vpop.f32.mrf.mxu0
  %680 = vmatprep.mubr.f32.mxu0 0.0
  %681 = vmatmul.mubr.f32.gmra.mxu0 %v277
  %v682 = vpop.f32.mrf.mxu0
  %v683 = vadd.f32 %v93, %v682
  %v684 = vpop.f32.mrf.mxu0
  %685 = vmatprep.mubr.f32.mxu0 0.0
  %686 = vmatmul.mubr.f32.gmra.mxu0 %v280
  %v687 = vpop.f32.mrf.mxu0
  %v688 = vadd.f32 %v93, %v687
  %v689 = vpop.f32.mrf.mxu0
  %690 = vmatprep.mubr.f32.mxu0 0.0
  %691 = vmatmul.mubr.f32.gmra.mxu0 %v283
  %v692 = vpop.f32.mrf.mxu0
  %v693 = vadd.f32 %v93, %v692
  %v694 = vpop.f32.mrf.mxu0
  %695 = vmatprep.mubr.f32.mxu0 0.0
  %696 = vmatmul.mubr.f32.gmra.mxu0 %v286
  %v697 = vpop.f32.mrf.mxu0
  %v698 = vadd.f32 %v93, %v697
  %v699 = vpop.f32.mrf.mxu0
  %700 = vmatprep.mubr.f32.mxu0 0.0
  %701 = vmatmul.mubr.f32.gmra.mxu0 %v289
  %v702 = vpop.f32.mrf.mxu0
  %v703 = vadd.f32 %v93, %v702
  %v704 = vpop.f32.mrf.mxu0
  %705 = vmatprep.mubr.f32.mxu0 0.0
  %706 = vmatmul.mubr.f32.gmra.mxu0 %v292
  %v707 = vpop.f32.mrf.mxu0
  %v708 = vadd.f32 %v93, %v707
  %v709 = vpop.f32.mrf.mxu0
  %710 = vmatprep.mubr.f32.mxu0 0.0
  %711 = vmatmul.mubr.f32.gmra.mxu0 %v295
  %v712 = vpop.f32.mrf.mxu0
  %v713 = vadd.f32 %v93, %v712
  %v714 = vpop.f32.mrf.mxu0
  %715 = vmatprep.mubr.f32.mxu0 0.0
  %716 = vmatmul.mubr.f32.gmra.mxu0 %v298
  %v717 = vpop.f32.mrf.mxu0
  %v718 = vadd.f32 %v93, %v717
  %v719 = vpop.f32.mrf.mxu0
  %720 = vmatprep.mubr.f32.mxu0 0.0
  %721 = vmatmul.mubr.f32.gmra.mxu0 %v301
  %v722 = vpop.f32.mrf.mxu0
  %v723 = vadd.f32 %v93, %v722
  %v724 = vpop.f32.mrf.mxu0
  %725 = vmatprep.mubr.f32.mxu0 0.0
  %726 = vmatmul.mubr.f32.gmra.mxu0 %v304
  %v727 = vpop.f32.mrf.mxu0
  %v728 = vadd.f32 %v93, %v727
  %v729 = vpop.f32.mrf.mxu0
  %730 = vmatprep.mubr.f32.mxu0 0.0
  %731 = vmatmul.mubr.f32.gmra.mxu0 %v307
  %v732 = vpop.f32.mrf.mxu0
  %v733 = vadd.f32 %v93, %v732
  %v734 = vpop.f32.mrf.mxu0
  %735 = vmatprep.mubr.f32.mxu0 0.0
  %736 = vmatmul.mubr.f32.gmra.mxu0 %v310
  %v737 = vpop.f32.mrf.mxu0
  %v738 = vadd.f32 %v93, %v737
  %v739 = vpop.f32.mrf.mxu0
  %740 = vdwg.mxu0
  %v741 = vmax.f32 %v383, %v473
  %v742 = vmax.f32 %v388, %v478
  %v743 = vmax.f32 %v393, %v483
  %v744 = vmax.f32 %v398, %v488
  %v745 = vmax.f32 %v403, %v493
  %v746 = vmax.f32 %v408, %v498
  %v747 = vmax.f32 %v413, %v503
  %v748 = vmax.f32 %v418, %v508
  %v749 = vmax.f32 %v423, %v513
  %v750 = vmax.f32 %v428, %v518
  %v751 = vmax.f32 %v433, %v523
  %v752 = vmax.f32 %v438, %v528
  %v753 = vmax.f32 %v443, %v533
  %v754 = vmax.f32 %v448, %v538
  %v755 = vmax.f32 %v453, %v543
  %v756 = vmax.f32 %v458, %v548
  %v757 = vmax.f32 %v463, %v553
  %v758 = vmax.f32 %v468, %v558
  %v759 = vmax.f32 %v563, %v653
  %v760 = vmax.f32 %v568, %v658
  %v761 = vmax.f32 %v573, %v663
  %v762 = vmax.f32 %v578, %v668
  %v763 = vmax.f32 %v583, %v673
  %v764 = vmax.f32 %v588, %v678
  %v765 = vmax.f32 %v593, %v683
  %v766 = vmax.f32 %v598, %v688
  %v767 = vmax.f32 %v603, %v693
  %v768 = vmax.f32 %v608, %v698
  %v769 = vmax.f32 %v613, %v703
  %v770 = vmax.f32 %v618, %v708
  %v771 = vmax.f32 %v623, %v713
  %v772 = vmax.f32 %v628, %v718
  %v773 = vmax.f32 %v633, %v723
  %v774 = vmax.f32 %v638, %v728
  %v775 = vmax.f32 %v643, %v733
  %v776 = vmax.f32 %v648, %v738
  %v777 = vmax.f32 %v741, %v759
  %v778 = vmax.f32 %v742, %v760
  %v779 = vmax.f32 %v743, %v761
  %v780 = vmax.f32 %v744, %v762
  %v781 = vmax.f32 %v745, %v763
  %v782 = vmax.f32 %v746, %v764
  %v783 = vmax.f32 %v747, %v765
  %v784 = vmax.f32 %v748, %v766
  %v785 = vmax.f32 %v749, %v767
  %v786 = vmax.f32 %v750, %v768
  %v787 = vmax.f32 %v751, %v769
  %v788 = vmax.f32 %v752, %v770
  %v789 = vmax.f32 %v753, %v771
  %v790 = vmax.f32 %v754, %v772
  %v791 = vmax.f32 %v755, %v773
  %v792 = vmax.f32 %v756, %v774
  %v793 = vmax.f32 %v757, %v775
  %v794 = vmax.f32 %v758, %v776
  %v795 = vmax.f32 %v777, 0.0
  %v796 = vmax.f32 %v778, 0.0
  %v797 = vmax.f32 %v779, 0.0
  %v798 = vmax.f32 %v780, 0.0
  %v799 = vmax.f32 %v781, 0.0
  %v800 = vmax.f32 %v782, 0.0
  %v801 = vmax.f32 %v783, 0.0
  %v802 = vmax.f32 %v784, 0.0
  %v803 = vmax.f32 %v785, 0.0
  %v804 = vmax.f32 %v786, 0.0
  %v805 = vmax.f32 %v787, 0.0
  %v806 = vmax.f32 %v788, 0.0
  %v807 = vmax.f32 %v789, 0.0
  %v808 = vmax.f32 %v790, 0.0
  %v809 = vmax.f32 %v791, 0.0
  %v810 = vmax.f32 %v792, 0.0
  %v811 = vmax.f32 %v793, 0.0
  %v812 = vmax.f32 %v794, 0.0
  %vm813 = vcmask 261120
  %814 = vst.msk [vmem:[%s3] sm:$0xff] %vm813, %v795
  %815 = vst.msk [vmem:[%s3 + $0x8] sm:$0xff] %vm813, %v796
  %816 = vst.msk [vmem:[%s3 + $0x10] sm:$0xff] %vm813, %v797
  %817 = vst.msk [vmem:[%s3 + $0x18] sm:$0xff] %vm813, %v798
  %818 = vst.msk [vmem:[%s3 + $0x20] sm:$0xff] %vm813, %v799
  %819 = vst.msk [vmem:[%s3 + $0x28] sm:$0xff] %vm813, %v800
  %820 = vst.msk [vmem:[%s3 + $0x30] sm:$0xff] %vm813, %v801
  %821 = vst.msk [vmem:[%s3 + $0x38] sm:$0xff] %vm813, %v802
  %822 = vst.msk [vmem:[%s3 + $0x40] sm:$0xff] %vm813, %v803
  %823 = vst.msk [vmem:[%s3 + $0x48] sm:$0xff] %vm813, %v804
  %824 = vst.msk [vmem:[%s3 + $0x50] sm:$0xff] %vm813, %v805
  %825 = vst.msk [vmem:[%s3 + $0x58] sm:$0xff] %vm813, %v806
  %826 = vst.msk [vmem:[%s3 + $0x60] sm:$0xff] %vm813, %v807
  %827 = vst.msk [vmem:[%s3 + $0x68] sm:$0xff] %vm813, %v808
  %828 = vst.msk [vmem:[%s3 + $0x70] sm:$0xff] %vm813, %v809
  %829 = vst.msk [vmem:[%s3 + $0x78] sm:$0xff] %vm813, %v810
  %830 = vst.msk [vmem:[%s3 + $0x80] sm:$0xff] %vm813, %v811
  %831 = vst.msk [vmem:[%s3 + $0x88] sm:$0xff] %vm813, %v812
  // Predicated region
  $region14: #{forward.2} parent=0 // pred_check
    _
  $region15: #{forward.2} parent=0 // pred_check_branch
    %833 = sbr.rel (0) target = $region17
  $region16: #{forward.2} parent=0 // pred_region
    _
  $region17: #{forward.2} parent=0 // pred_fallthru
    _
  // Predicated region
  $region18: #{forward.2} parent=0 // pred_check
    _
  $region19: #{forward.2} parent=0 // pred_check_branch
    %835 = sbr.rel (0) target = $region21
  $region20: #{forward.2} parent=0 // pred_region
    _
  $region21: #{forward.2} parent=0 // pred_fallthru
    _

// kernel: forward.3
$region0: #{forward.3}
  #allocation0 [shape = 'u32[]', space=smem, size = 0x4, offset = 0x4, fixed_abs, tag = 'smem constant byte address 0x4 - core index']
  #allocation1 [shape = 'u32[144,128]{1,0:T(1,128)}', space=vmem, size = 0x12000, scoped, tag = 'internal scratch']
  %s0 = inlined_call_operand.vmem [shape: f32[64,288], index: 0, kind: input, shape index: {}]
  %s1 = inlined_call_operand.vmem [shape: f32[288,64], index: 1, kind: input, shape index: {}]
  %s2 = inlined_call_operand.vmem [shape: f32[1,64], index: 2, kind: input, shape index: {}]
  %s3 = inlined_call_operand.vmem [shape: f32[256,200], index: 3, kind: input, shape index: {}]
  %s4 = inlined_call_operand.vmem [shape: f32[1,200], index: 4, kind: input, shape index: {}]
  %s5 = inlined_call_operand.vmem [shape: f32[200,10], index: 5, kind: input, shape index: {}]
  %s6 = inlined_call_operand.vmem [shape: f32[1,10], index: 6, kind: input, shape index: {}]
  %s7 = inlined_call_operand.vmem [shape: f32[10,300], index: 7, kind: input, shape index: {}]
  %s8 = inlined_call_operand.vmem [shape: f32[10,300], index: 8, kind: input, shape index: {}]
  %s9 = inlined_call_operand.vmem [shape: f32[1,300], index: 9, kind: input, shape index: {}]
  %s10 = inlined_call_operand.vmem [shape: f32[300,300], index: 10, kind: input, shape index: {}]
  %s11 = inlined_call_operand.vmem [shape: f32[1,300], index: 11, kind: input, shape index: {}]
  %s12 = inlined_call_operand.vmem [shape: f32[300,2], index: 12, kind: input, shape index: {}]
  %s13 = inlined_call_operand.vmem [shape: f32[1,2], index: 13, kind: input, shape index: {}]
  %s14 = inlined_call_operand.vmem [shape: f32[4,10], index: 14, kind: output, shape index: {0}]
  %s15 = inlined_call_operand.hbm [shape: f32[2,2], index: 15, kind: output, shape index: {1}]
  %16 = xla_tuple %s14, %s15
  %s17 = sld [smem:[#allocation0]]
  $region74: #{forward.3} parent=0
    _
  %s19 = ssub.s32 1, %s17
  %s20 = scalar_select 0, %s19, %s17
  $region1: #{forward.3} parent=0
    #allocation2 [shape = 'u8[1024]{0}', space=vmem, size = 0x400, scoped, tag = 'output window, operand 1, single buffered']
    #allocation3 [shape = 's32[1]{0}', space=sflag, size = 0x4, scoped, tag = 'scoped memory for forward.3']
    %21 = vsyncpa [#allocation3], 0
    // Predicated region
    $region2: #{forward.3} parent=1 // pred_check
      _
    $region3: #{forward.3} parent=1 // pred_check_branch
      %23 = sbr.rel (0) target = $region5
    $region4: #{forward.3} parent=1 // pred_region
      _
    $region5: #{forward.3} parent=1 // pred_fallthru
      _
    // Predicated region
    $region6: #{forward.3} parent=1 // pred_check
      _
    $region7: #{forward.3} parent=1 // pred_check_branch
      %25 = sbr.rel (0) target = $region9
    $region8: #{forward.3} parent=1 // pred_region
      _
    $region9: #{forward.3} parent=1 // pred_fallthru
      _
    // Predicated region
    $region10: #{forward.3} parent=1 // pred_check
      _
    $region11: #{forward.3} parent=1 // pred_check_branch
      %27 = sbr.rel (0) target = $region13
    $region12: #{forward.3} parent=1 // pred_region
      _
    $region13: #{forward.3} parent=1 // pred_fallthru
      _
    // Predicated region
    $region14: #{forward.3} parent=1 // pred_check
      _
    $region15: #{forward.3} parent=1 // pred_check_branch
      %29 = sbr.rel (0) target = $region17
    $region16: #{forward.3} parent=1 // pred_region
      _
    $region17: #{forward.3} parent=1 // pred_fallthru
      _
    // Predicated region
    $region18: #{forward.3} parent=1 // pred_check
      _
    $region19: #{forward.3} parent=1 // pred_check_branch
      %31 = sbr.rel (0) target = $region21
    $region20: #{forward.3} parent=1 // pred_region
      _
    $region21: #{forward.3} parent=1 // pred_fallthru
      _
    // Predicated region
    $region22: #{forward.3} parent=1 // pred_check
      _
    $region23: #{forward.3} parent=1 // pred_check_branch
      %33 = sbr.rel (0) target = $region25
    $region24: #{forward.3} parent=1 // pred_region
      _
    $region25: #{forward.3} parent=1 // pred_fallthru
      _
    // Predicated region
    $region26: #{forward.3} parent=1 // pred_check
      _
    $region27: #{forward.3} parent=1 // pred_check_branch
      %35 = sbr.rel (0) target = $region29
    $region28: #{forward.3} parent=1 // pred_region
      _
    $region29: #{forward.3} parent=1 // pred_fallthru
      _
    // Predicated region
    $region30: #{forward.3} parent=1 // pred_check
      _
    $region31: #{forward.3} parent=1 // pred_check_branch
      %37 = sbr.rel (0) target = $region33
    $region32: #{forward.3} parent=1 // pred_region
      _
    $region33: #{forward.3} parent=1 // pred_fallthru
      _
    // Predicated region
    $region34: #{forward.3} parent=1 // pred_check
      _
    $region35: #{forward.3} parent=1 // pred_check_branch
      %39 = sbr.rel (0) target = $region37
    $region36: #{forward.3} parent=1 // pred_region
      _
    $region37: #{forward.3} parent=1 // pred_fallthru
      _
    // Predicated region
    $region38: #{forward.3} parent=1 // pred_check
      _
    $region39: #{forward.3} parent=1 // pred_check_branch
      %41 = sbr.rel (0) target = $region41
    $region40: #{forward.3} parent=1 // pred_region
      _
    $region41: #{forward.3} parent=1 // pred_fallthru
      _
    // Predicated region
    $region42: #{forward.3} parent=1 // pred_check
      _
    $region43: #{forward.3} parent=1 // pred_check_branch
      %43 = sbr.rel (0) target = $region45
    $region44: #{forward.3} parent=1 // pred_region
      _
    $region45: #{forward.3} parent=1 // pred_fallthru
      _
    // Predicated region
    $region46: #{forward.3} parent=1 // pred_check
      _
    $region47: #{forward.3} parent=1 // pred_check_branch
      %45 = sbr.rel (0) target = $region49
    $region48: #{forward.3} parent=1 // pred_region
      _
    $region49: #{forward.3} parent=1 // pred_fallthru
      _
    // Predicated region
    $region50: #{forward.3} parent=1 // pred_check
      _
    $region51: #{forward.3} parent=1 // pred_check_branch
      %47 = sbr.rel (0) target = $region53
    $region52: #{forward.3} parent=1 // pred_region
      _
    $region53: #{forward.3} parent=1 // pred_fallthru
      _
    // Predicated region
    $region54: #{forward.3} parent=1 // pred_check
      _
    $region55: #{forward.3} parent=1 // pred_check_branch
      %49 = sbr.rel (0) target = $region57
    $region56: #{forward.3} parent=1 // pred_region
      _
    $region57: #{forward.3} parent=1 // pred_fallthru
      _
    %v50 = vld [vmem:[%s0] sm:$0xff]
    %v51 = vld [vmem:[%s0 + $0x8] sm:$0xff]
    %v52 = vld [vmem:[%s0 + $0x10] sm:$0xff]
    %v53 = vld [vmem:[%s0 + $0x18] sm:$0xff]
    %v54 = vld [vmem:[%s0 + $0x20] sm:$0xff]
    %v55 = vld [vmem:[%s0 + $0x28] sm:$0xff]
    %v56 = vld [vmem:[%s0 + $0x30] sm:$0xff]
    %v57 = vld [vmem:[%s0 + $0x38] sm:$0xff]
    %v58 = vld [vmem:[%s0 + $0x40] sm:$0xff]
    %v59 = vld [vmem:[%s0 + $0x48] sm:$0xff]
    %v60 = vld [vmem:[%s0 + $0x50] sm:$0xff]
    %v61 = vld [vmem:[%s0 + $0x58] sm:$0xff]
    %v62 = vld [vmem:[%s0 + $0x60] sm:$0xff]
    %v63 = vld [vmem:[%s0 + $0x68] sm:$0xff]
    %v64 = vld [vmem:[%s0 + $0x70] sm:$0xff]
    %v65 = vld [vmem:[%s0 + $0x78] sm:$0xff]
    %v66 = vld [vmem:[%s0 + $0x80] sm:$0xff]
    %v67 = vld [vmem:[%s0 + $0x88] sm:$0xff]
    %v68 = vld [vmem:[%s0 + $0x90] sm:$0xff]
    %v69 = vld [vmem:[%s0 + $0x98] sm:$0xff]
    %v70 = vld [vmem:[%s0 + $0xa0] sm:$0xff]
    %v71 = vld [vmem:[%s0 + $0xa8] sm:$0xff]
    %v72 = vld [vmem:[%s0 + $0xb0] sm:$0xff]
    %v73 = vld [vmem:[%s0 + $0xb8] sm:$0xff]
    %v74 = vld [vmem:[%s1] sm:$0xff]
    %v75 = vld [vmem:[%s1 + $0x8] sm:$0xff]
    %v76 = vld [vmem:[%s1 + $0x10] sm:$0xff]
    %v77 = vld [vmem:[%s1 + $0x18] sm:$0xff]
    %v78 = vld [vmem:[%s1 + $0x20] sm:$0xff]
    %v79 = vld [vmem:[%s1 + $0x28] sm:$0xff]
    %v80 = vld [vmem:[%s1 + $0x30] sm:$0xff]
    %v81 = vld [vmem:[%s1 + $0x38] sm:$0xff]
    %v82 = vld [vmem:[%s1 + $0x40] sm:$0xff]
    %v83 = vld [vmem:[%s1 + $0x48] sm:$0xff]
    %v84 = vld [vmem:[%s1 + $0x50] sm:$0xff]
    %v85 = vld [vmem:[%s1 + $0x58] sm:$0xff]
    %v86 = vld [vmem:[%s1 + $0x60] sm:$0xff]
    %v87 = vld [vmem:[%s1 + $0x68] sm:$0xff]
    %v88 = vld [vmem:[%s1 + $0x70] sm:$0xff]
    %v89 = vld [vmem:[%s1 + $0x78] sm:$0xff]
    %v90 = vld [vmem:[%s1 + $0x80] sm:$0xff]
    %v91 = vld [vmem:[%s1 + $0x88] sm:$0xff]
    %v92 = vld [vmem:[%s1 + $0x90] sm:$0xff]
    %v93 = vld [vmem:[%s1 + $0x98] sm:$0xff]
    %v94 = vld [vmem:[%s1 + $0xa0] sm:$0xff]
    %v95 = vld [vmem:[%s1 + $0xa8] sm:$0xff]
    %v96 = vld [vmem:[%s1 + $0xb0] sm:$0xff]
    %v97 = vld [vmem:[%s1 + $0xb8] sm:$0xff]
    %v98 = vld [vmem:[%s1 + $0xc0] sm:$0xff]
    %v99 = vld [vmem:[%s1 + $0xc8] sm:$0xff]
    %v100 = vld [vmem:[%s1 + $0xd0] sm:$0xff]
    %v101 = vld [vmem:[%s1 + $0xd8] sm:$0xff]
    %v102 = vld [vmem:[%s1 + $0xe0] sm:$0xff]
    %v103 = vld [vmem:[%s1 + $0xe8] sm:$0xff]
    %v104 = vld [vmem:[%s1 + $0xf0] sm:$0xff]
    %v105 = vld [vmem:[%s1 + $0xf8] sm:$0xff]
    %v106 = vld [vmem:[%s1 + $0x100] sm:$0xff]
    %v107 = vld [vmem:[%s1 + $0x108] sm:$0xff]
    %v108 = vld [vmem:[%s1 + $0x110] sm:$0xff]
    %v109 = vld [vmem:[%s1 + $0x118] sm:$0xff]
    %v110 = vld [vmem:[%s2] sm:$0x1]
    %v112 = vlaneseq
    %v113 = vshrl.u32 %v112, 7
    %v114 = vsub.s32 0, %v113
    %v115 = vrot.slane %v110, %v114
    %vm117 = vcmask 261120
    %v119 = vsel %vm117, %v52, 0
    %v122 = vsel %vm117, %v55, 0
    %v125 = vsel %vm117, %v58, 0
    %v128 = vsel %vm117, %v61, 0
    %v131 = vsel %vm117, %v64, 0
    %v134 = vsel %vm117, %v67, 0
    %v137 = vsel %vm117, %v70, 0
    %v140 = vsel %vm117, %v73, 0
    %142 = vmatprep.subr.mxu0 0.0
    %143 = vmatpush1.msra.mxu0 %v89
    %144 = vmatprep.subr.mxu0 0.0
    %145 = vmatpush1.msra.mxu0 %v88
    %146 = vmatprep.subr.mxu0 0.0
    %147 = vmatpush1.msra.mxu0 %v87
    %148 = vmatprep.subr.mxu0 0.0
    %149 = vmatpush1.msra.mxu0 %v86
    %150 = vmatprep.subr.mxu0 0.0
    %151 = vmatpush1.msra.mxu0 %v85
    %152 = vmatprep.subr.mxu0 0.0
    %153 = vmatpush1.msra.mxu0 %v84
    %154 = vmatprep.subr.mxu0 0.0
    %155 = vmatpush1.msra.mxu0 %v83
    %156 = vmatprep.subr.mxu0 0.0
    %157 = vmatpush1.msra.mxu0 %v82
    %158 = vmatprep.subr.mxu0 0.0
    %159 = vmatpush1.msra.mxu0 %v81
    %160 = vmatprep.subr.mxu0 0.0
    %161 = vmatpush1.msra.mxu0 %v80
    %162 = vmatprep.subr.mxu0 0.0
    %163 = vmatpush1.msra.mxu0 %v79
    %164 = vmatprep.subr.mxu0 0.0
    %165 = vmatpush1.msra.mxu0 %v78
    %166 = vmatprep.subr.mxu0 0.0
    %167 = vmatpush1.msra.mxu0 %v77
    %168 = vmatprep.subr.mxu0 0.0
    %169 = vmatpush1.msra.mxu0 %v76
    %170 = vmatprep.subr.mxu0 0.0
    %171 = vmatpush1.msra.mxu0 %v75
    %172 = vmatprep.subr.mxu0 0.0
    %173 = vmatpush1.msra.mxu0 %v74
    %174 = vmatprep.subr.mxu0 0.0
    %175 = vmatpush2.msra.mxu0 %v105
    %176 = vmatprep.subr.mxu0 0.0
    %177 = vmatpush2.msra.mxu0 %v104
    %178 = vmatprep.subr.mxu0 0.0
    %179 = vmatpush2.msra.mxu0 %v103
    %180 = vmatprep.subr.mxu0 0.0
    %181 = vmatpush2.msra.mxu0 %v102
    %182 = vmatprep.subr.mxu0 0.0
    %183 = vmatpush2.msra.mxu0 %v101
    %184 = vmatprep.subr.mxu0 0.0
    %185 = vmatpush2.msra.mxu0 %v100
    %186 = vmatprep.subr.mxu0 0.0
    %187 = vmatpush2.msra.mxu0 %v99
    %188 = vmatprep.subr.mxu0 0.0
    %189 = vmatpush2.msra.mxu0 %v98
    %190 = vmatprep.subr.mxu0 0.0
    %191 = vmatpush2.msra.mxu0 %v97
    %192 = vmatprep.subr.mxu0 0.0
    %193 = vmatpush2.msra.mxu0 %v96
    %194 = vmatprep.subr.mxu0 0.0
    %195 = vmatpush2.msra.mxu0 %v95
    %196 = vmatprep.subr.mxu0 0.0
    %197 = vmatpush2.msra.mxu0 %v94
    %198 = vmatprep.subr.mxu0 0.0
    %199 = vmatpush2.msra.mxu0 %v93
    %200 = vmatprep.subr.mxu0 0.0
    %201 = vmatpush2.msra.mxu0 %v92
    %202 = vmatprep.subr.mxu0 0.0
    %203 = vmatpush2.msra.mxu0 %v91
    %204 = vmatprep.subr.mxu0 0.0
    %205 = vmatpush2.msra.mxu0 %v90
    %206 = vmatprep.mubr.f32.mxu0 %v51
    %207 = vmatmul.mubr.f32.gmra.mxu0 %v50
    %v208 = vpop.f32.mrf.mxu0
    %v209 = vadd.f32 %v115, %v208
    %v210 = vpop.f32.mrf.mxu0
    %211 = vmatprep.mubr.f32.mxu0 %v54
    %212 = vmatmul.mubr.f32.gmra.mxu0 %v53
    %v213 = vpop.f32.mrf.mxu0
    %v214 = vadd.f32 %v115, %v213
    %v215 = vpop.f32.mrf.mxu0
    %216 = vmatprep.mubr.f32.mxu0 %v57
    %217 = vmatmul.mubr.f32.gmra.mxu0 %v56
    %v218 = vpop.f32.mrf.mxu0
    %v219 = vadd.f32 %v115, %v218
    %v220 = vpop.f32.mrf.mxu0
    %221 = vmatprep.mubr.f32.mxu0 %v60
    %222 = vmatmul.mubr.f32.gmra.mxu0 %v59
    %v223 = vpop.f32.mrf.mxu0
    %v224 = vadd.f32 %v115, %v223
    %v225 = vpop.f32.mrf.mxu0
    %226 = vmatprep.mubr.f32.mxu0 %v63
    %227 = vmatmul.mubr.f32.gmra.mxu0 %v62
    %v228 = vpop.f32.mrf.mxu0
    %v229 = vadd.f32 %v115, %v228
    %v230 = vpop.f32.mrf.mxu0
    %231 = vmatprep.mubr.f32.mxu0 %v66
    %232 = vmatmul.mubr.f32.gmra.mxu0 %v65
    %v233 = vpop.f32.mrf.mxu0
    %v234 = vadd.f32 %v115, %v233
    %v235 = vpop.f32.mrf.mxu0
    %236 = vmatprep.mubr.f32.mxu0 %v69
    %237 = vmatmul.mubr.f32.gmra.mxu0 %v68
    %v238 = vpop.f32.mrf.mxu0
    %v239 = vadd.f32 %v115, %v238
    %v240 = vpop.f32.mrf.mxu0
    %241 = vmatprep.mubr.f32.mxu0 %v72
    %242 = vmatmul.mubr.f32.gmra.mxu0 %v71
    %v243 = vpop.f32.mrf.mxu0
    %v244 = vadd.f32 %v115, %v243
    %v245 = vpop.f32.mrf.mxu0
    %246 = vdwg.mxu0
    %247 = vmatprep.subr.mxu0 0.0
    %248 = vmatpush1.msra.mxu0 0.0
    %249 = vmatprep.subr.mxu0 0.0
    %250 = vmatpush1.msra.mxu0 0.0
    %251 = vmatprep.subr.mxu0 0.0
    %252 = vmatpush1.msra.mxu0 0.0
    %253 = vmatprep.subr.mxu0 0.0
    %254 = vmatpush1.msra.mxu0 0.0
    %255 = vmatprep.subr.mxu0 0.0
    %256 = vmatpush1.msra.mxu0 0.0
    %257 = vmatprep.subr.mxu0 0.0
    %258 = vmatpush1.msra.mxu0 0.0
    %259 = vmatprep.subr.mxu0 0.0
    %260 = vmatpush1.msra.mxu0 0.0
    %261 = vmatprep.subr.mxu0 0.0
    %262 = vmatpush1.msra.mxu0 0.0
    %263 = vmatprep.subr.mxu0 0.0
    %264 = vmatpush1.msra.mxu0 0.0
    %265 = vmatprep.subr.mxu0 0.0
    %266 = vmatpush1.msra.mxu0 0.0
    %267 = vmatprep.subr.mxu0 0.0
    %268 = vmatpush1.msra.mxu0 0.0
    %269 = vmatprep.subr.mxu0 0.0
    %270 = vmatpush1.msra.mxu0 0.0
    %271 = vmatprep.subr.mxu0 0.0
    %272 = vmatpush1.msra.mxu0 %v109
    %273 = vmatprep.subr.mxu0 0.0
    %274 = vmatpush1.msra.mxu0 %v108
    %275 = vmatprep.subr.mxu0 0.0
    %276 = vmatpush1.msra.mxu0 %v107
    %277 = vmatprep.subr.mxu0 0.0
    %278 = vmatpush1.msra.mxu0 %v106
    %279 = vmatprep.subr.mxu0 0.0
    %280 = vmatpush2.msra.mxu0 0.0
    %281 = vmatprep.subr.mxu0 0.0
    %282 = vmatpush2.msra.mxu0 0.0
    %283 = vmatprep.subr.mxu0 0.0
    %284 = vmatpush2.msra.mxu0 0.0
    %285 = vmatprep.subr.mxu0 0.0
    %286 = vmatpush2.msra.mxu0 0.0
    %287 = vmatprep.subr.mxu0 0.0
    %288 = vmatpush2.msra.mxu0 0.0
    %289 = vmatprep.subr.mxu0 0.0
    %290 = vmatpush2.msra.mxu0 0.0
    %291 = vmatprep.subr.mxu0 0.0
    %292 = vmatpush2.msra.mxu0 0.0
    %293 = vmatprep.subr.mxu0 0.0
    %294 = vmatpush2.msra.mxu0 0.0
    %295 = vmatprep.subr.mxu0 0.0
    %296 = vmatpush2.msra.mxu0 0.0
    %297 = vmatprep.subr.mxu0 0.0
    %298 = vmatpush2.msra.mxu0 0.0
    %299 = vmatprep.subr.mxu0 0.0
    %300 = vmatpush2.msra.mxu0 0.0
    %301 = vmatprep.subr.mxu0 0.0
    %302 = vmatpush2.msra.mxu0 0.0
    %303 = vmatprep.subr.mxu0 0.0
    %304 = vmatpush2.msra.mxu0 0.0
    %305 = vmatprep.subr.mxu0 0.0
    %306 = vmatpush2.msra.mxu0 0.0
    %307 = vmatprep.subr.mxu0 0.0
    %308 = vmatpush2.msra.mxu0 0.0
    %309 = vmatprep.subr.mxu0 0.0
    %310 = vmatpush2.msra.mxu0 0.0
    %311 = vmatprep.mubr.f32.mxu0 0.0
    %312 = vmatmul.mubr.f32.gmra.mxu0 %v119
    %v313 = vpop.f32.mrf.mxu0
    %v314 = vadd.f32 %v209, %v313
    %v315 = vpop.f32.mrf.mxu0
    %316 = vmatprep.mubr.f32.mxu0 0.0
    %317 = vmatmul.mubr.f32.gmra.mxu0 %v122
    %v318 = vpop.f32.mrf.mxu0
    %v319 = vadd.f32 %v214, %v318
    %v320 = vpop.f32.mrf.mxu0
    %321 = vmatprep.mubr.f32.mxu0 0.0
    %322 = vmatmul.mubr.f32.gmra.mxu0 %v125
    %v323 = vpop.f32.mrf.mxu0
    %v324 = vadd.f32 %v219, %v323
    %v325 = vpop.f32.mrf.mxu0
    %326 = vmatprep.mubr.f32.mxu0 0.0
    %327 = vmatmul.mubr.f32.gmra.mxu0 %v128
    %v328 = vpop.f32.mrf.mxu0
    %v329 = vadd.f32 %v224, %v328
    %v330 = vpop.f32.mrf.mxu0
    %331 = vmatprep.mubr.f32.mxu0 0.0
    %332 = vmatmul.mubr.f32.gmra.mxu0 %v131
    %v333 = vpop.f32.mrf.mxu0
    %v334 = vadd.f32 %v229, %v333
    %v335 = vpop.f32.mrf.mxu0
    %336 = vmatprep.mubr.f32.mxu0 0.0
    %337 = vmatmul.mubr.f32.gmra.mxu0 %v134
    %v338 = vpop.f32.mrf.mxu0
    %v339 = vadd.f32 %v234, %v338
    %v340 = vpop.f32.mrf.mxu0
    %341 = vmatprep.mubr.f32.mxu0 0.0
    %342 = vmatmul.mubr.f32.gmra.mxu0 %v137
    %v343 = vpop.f32.mrf.mxu0
    %v344 = vadd.f32 %v239, %v343
    %v345 = vpop.f32.mrf.mxu0
    %346 = vmatprep.mubr.f32.mxu0 0.0
    %347 = vmatmul.mubr.f32.gmra.mxu0 %v140
    %v348 = vpop.f32.mrf.mxu0
    %v349 = vadd.f32 %v244, %v348
    %v350 = vpop.f32.mrf.mxu0
    %351 = vdwg.mxu0
    %v352 = vmax.f32 %v314, %v324
    %v353 = vmax.f32 %v319, %v329
    %v354 = vmax.f32 %v334, %v344
    %v355 = vmax.f32 %v339, %v349
    %v356 = vmax.f32 %v352, %v354
    %v357 = vmax.f32 %v353, %v355
    %v358 = vmax.f32 %v356, 0.0
    %v359 = vmax.f32 %v357, 0.0
    %v360 = vld [vmem:[%s4] sm:$0x3]
    %v361 = vld [vmem:[%s3] sm:$0xff]
    %v362 = vld [vmem:[%s3 + $0x8] sm:$0xff]
    %v363 = vld [vmem:[%s3 + $0x10] sm:$0xff]
    %v364 = vld [vmem:[%s3 + $0x18] sm:$0xff]
    %v365 = vld [vmem:[%s3 + $0x20] sm:$0xff]
    %v366 = vld [vmem:[%s3 + $0x28] sm:$0xff]
    %v367 = vld [vmem:[%s3 + $0x30] sm:$0xff]
    %v368 = vld [vmem:[%s3 + $0x38] sm:$0xff]
    %v369 = vld [vmem:[%s3 + $0x40] sm:$0xff]
    %v370 = vld [vmem:[%s3 + $0x48] sm:$0xff]
    %v371 = vld [vmem:[%s3 + $0x50] sm:$0xff]
    %v372 = vld [vmem:[%s3 + $0x58] sm:$0xff]
    %v373 = vld [vmem:[%s3 + $0x60] sm:$0xff]
    %v374 = vld [vmem:[%s3 + $0x68] sm:$0xff]
    %v375 = vld [vmem:[%s3 + $0x70] sm:$0xff]
    %v376 = vld [vmem:[%s3 + $0x78] sm:$0xff]
    %vm377 = vcmask 523264
    %v379 = vsel %vm377, %v358, 0
    %381 = vmatprep.subr.mxu0 0.0
    %382 = vmatpush1.msra.mxu0 0.0
    %383 = vmatprep.subr.mxu0 0.0
    %384 = vmatpush1.msra.mxu0 0.0
    %385 = vmatprep.subr.mxu0 0.0
    %386 = vmatpush1.msra.mxu0 0.0
    %387 = vmatprep.subr.mxu0 0.0
    %388 = vmatpush1.msra.mxu0 0.0
    %389 = vmatprep.subr.mxu0 0.0
    %390 = vmatpush1.msra.mxu0 0.0
    %391 = vmatprep.subr.mxu0 0.0
    %392 = vmatpush1.msra.mxu0 0.0
    %393 = vmatprep.subr.mxu0 0.0
    %394 = vmatpush1.msra.mxu0 0.0
    %395 = vmatprep.subr.mxu0 0.0
    %396 = vmatpush1.msra.mxu0 0.0
    %397 = vmatprep.subr.mxu0 %v376
    %398 = vmatpush1.msra.mxu0 %v375
    %399 = vmatprep.subr.mxu0 %v374
    %400 = vmatpush1.msra.mxu0 %v373
    %401 = vmatprep.subr.mxu0 %v372
    %402 = vmatpush1.msra.mxu0 %v371
    %403 = vmatprep.subr.mxu0 %v370
    %404 = vmatpush1.msra.mxu0 %v369
    %405 = vmatprep.subr.mxu0 %v368
    %406 = vmatpush1.msra.mxu0 %v367
    %407 = vmatprep.subr.mxu0 %v366
    %408 = vmatpush1.msra.mxu0 %v365
    %409 = vmatprep.subr.mxu0 %v364
    %410 = vmatpush1.msra.mxu0 %v363
    %411 = vmatprep.subr.mxu0 %v362
    %412 = vmatpush1.msra.mxu0 %v361
    %413 = vmatprep.subr.mxu0 0.0
    %414 = vmatpush2.msra.mxu0 0.0
    %415 = vmatprep.subr.mxu0 0.0
    %416 = vmatpush2.msra.mxu0 0.0
    %417 = vmatprep.subr.mxu0 0.0
    %418 = vmatpush2.msra.mxu0 0.0
    %419 = vmatprep.subr.mxu0 0.0
    %420 = vmatpush2.msra.mxu0 0.0
    %421 = vmatprep.subr.mxu0 0.0
    %422 = vmatpush2.msra.mxu0 0.0
    %423 = vmatprep.subr.mxu0 0.0
    %424 = vmatpush2.msra.mxu0 0.0
    %425 = vmatprep.subr.mxu0 0.0
    %426 = vmatpush2.msra.mxu0 0.0
    %427 = vmatprep.subr.mxu0 0.0
    %428 = vmatpush2.msra.mxu0 0.0
    %429 = vmatprep.subr.mxu0 0.0
    %430 = vmatpush2.msra.mxu0 0.0
    %431 = vmatprep.subr.mxu0 0.0
    %432 = vmatpush2.msra.mxu0 0.0
    %433 = vmatprep.subr.mxu0 0.0
    %434 = vmatpush2.msra.mxu0 0.0
    %435 = vmatprep.subr.mxu0 0.0
    %436 = vmatpush2.msra.mxu0 0.0
    %437 = vmatprep.subr.mxu0 0.0
    %438 = vmatpush2.msra.mxu0 0.0
    %439 = vmatprep.subr.mxu0 0.0
    %440 = vmatpush2.msra.mxu0 0.0
    %441 = vmatprep.subr.mxu0 0.0
    %442 = vmatpush2.msra.mxu0 0.0
    %443 = vmatprep.subr.mxu0 0.0
    %444 = vmatpush2.msra.mxu0 0.0
    %445 = vmatprep.mubr.f32.mxu0 0.0
    %446 = vmatmul.mubr.f32.gmra.mxu0 %v379
    %v447 = vpop.f32.mrf.mxu0
    %v448 = vadd.f32 0.0, %v447
    %v449 = vpop.f32.mrf.mxu0
    %v450 = vadd.f32 0.0, %v449
    %451 = vdwg.mxu0
    %v453 = vlaneseq
    %v454 = vshrl.u32 %v453, 7
    %v455 = vsub.s32 0, %v454
    %v456 = vrot.slane %v360, %v455
    %v457 = vlaneseq
    %v458 = vshrl.u32 %v457, 7
    %v459 = vsub.s32 1, %v458
    %v460 = vrot.slane %v360, %v459
    %v463 = vadd.f32 %v456, %v448
    %v464 = vadd.f32 %v460, %v450
    %v465 = vld [vmem:[%s3 + $0x80] sm:$0xff]
    %v466 = vld [vmem:[%s3 + $0x88] sm:$0xff]
    %v467 = vld [vmem:[%s3 + $0x90] sm:$0xff]
    %v468 = vld [vmem:[%s3 + $0x98] sm:$0xff]
    %v469 = vld [vmem:[%s3 + $0xa0] sm:$0xff]
    %v470 = vld [vmem:[%s3 + $0xa8] sm:$0xff]
    %v471 = vld [vmem:[%s3 + $0xb0] sm:$0xff]
    %v472 = vld [vmem:[%s3 + $0xb8] sm:$0xff]
    %v473 = vld [vmem:[%s3 + $0xc0] sm:$0xff]
    %v474 = vld [vmem:[%s3 + $0xc8] sm:$0xff]
    %v475 = vld [vmem:[%s3 + $0xd0] sm:$0xff]
    %v476 = vld [vmem:[%s3 + $0xd8] sm:$0xff]
    %v477 = vld [vmem:[%s3 + $0xe0] sm:$0xff]
    %v478 = vld [vmem:[%s3 + $0xe8] sm:$0xff]
    %v479 = vld [vmem:[%s3 + $0xf0] sm:$0xff]
    %v480 = vld [vmem:[%s3 + $0xf8] sm:$0xff]
    %v481 = vrot.slane %v358, 4
    %v482 = vsel %vm377, %v481, 0
    %484 = vmatprep.subr.mxu0 0.0
    %485 = vmatpush1.msra.mxu0 0.0
    %486 = vmatprep.subr.mxu0 0.0
    %487 = vmatpush1.msra.mxu0 0.0
    %488 = vmatprep.subr.mxu0 0.0
    %489 = vmatpush1.msra.mxu0 0.0
    %490 = vmatprep.subr.mxu0 0.0
    %491 = vmatpush1.msra.mxu0 0.0
    %492 = vmatprep.subr.mxu0 0.0
    %493 = vmatpush1.msra.mxu0 0.0
    %494 = vmatprep.subr.mxu0 0.0
    %495 = vmatpush1.msra.mxu0 0.0
    %496 = vmatprep.subr.mxu0 0.0
    %497 = vmatpush1.msra.mxu0 0.0
    %498 = vmatprep.subr.mxu0 0.0
    %499 = vmatpush1.msra.mxu0 0.0
    %500 = vmatprep.subr.mxu0 %v480
    %501 = vmatpush1.msra.mxu0 %v479
    %502 = vmatprep.subr.mxu0 %v478
    %503 = vmatpush1.msra.mxu0 %v477
    %504 = vmatprep.subr.mxu0 %v476
    %505 = vmatpush1.msra.mxu0 %v475
    %506 = vmatprep.subr.mxu0 %v474
    %507 = vmatpush1.msra.mxu0 %v473
    %508 = vmatprep.subr.mxu0 %v472
    %509 = vmatpush1.msra.mxu0 %v471
    %510 = vmatprep.subr.mxu0 %v470
    %511 = vmatpush1.msra.mxu0 %v469
    %512 = vmatprep.subr.mxu0 %v468
    %513 = vmatpush1.msra.mxu0 %v467
    %514 = vmatprep.subr.mxu0 %v466
    %515 = vmatpush1.msra.mxu0 %v465
    %516 = vmatprep.subr.mxu0 0.0
    %517 = vmatpush2.msra.mxu0 0.0
    %518 = vmatprep.subr.mxu0 0.0
    %519 = vmatpush2.msra.mxu0 0.0
    %520 = vmatprep.subr.mxu0 0.0
    %521 = vmatpush2.msra.mxu0 0.0
    %522 = vmatprep.subr.mxu0 0.0
    %523 = vmatpush2.msra.mxu0 0.0
    %524 = vmatprep.subr.mxu0 0.0
    %525 = vmatpush2.msra.mxu0 0.0
    %526 = vmatprep.subr.mxu0 0.0
    %527 = vmatpush2.msra.mxu0 0.0
    %528 = vmatprep.subr.mxu0 0.0
    %529 = vmatpush2.msra.mxu0 0.0
    %530 = vmatprep.subr.mxu0 0.0
    %531 = vmatpush2.msra.mxu0 0.0
    %532 = vmatprep.subr.mxu0 0.0
    %533 = vmatpush2.msra.mxu0 0.0
    %534 = vmatprep.subr.mxu0 0.0
    %535 = vmatpush2.msra.mxu0 0.0
    %536 = vmatprep.subr.mxu0 0.0
    %537 = vmatpush2.msra.mxu0 0.0
    %538 = vmatprep.subr.mxu0 0.0
    %539 = vmatpush2.msra.mxu0 0.0
    %540 = vmatprep.subr.mxu0 0.0
    %541 = vmatpush2.msra.mxu0 0.0
    %542 = vmatprep.subr.mxu0 0.0
    %543 = vmatpush2.msra.mxu0 0.0
    %544 = vmatprep.subr.mxu0 0.0
    %545 = vmatpush2.msra.mxu0 0.0
    %546 = vmatprep.subr.mxu0 0.0
    %547 = vmatpush2.msra.mxu0 0.0
    %548 = vmatprep.mubr.f32.mxu0 0.0
    %549 = vmatmul.mubr.f32.gmra.mxu0 %v482
    %v550 = vpop.f32.mrf.mxu0
    %v551 = vadd.f32 0.0, %v550
    %v552 = vpop.f32.mrf.mxu0
    %v553 = vadd.f32 0.0, %v552
    %554 = vdwg.mxu0
    %v555 = vadd.f32 %v463, %v551
    %v556 = vadd.f32 %v464, %v553
    %v557 = vld [vmem:[%s3 + $0x100] sm:$0xff]
    %v558 = vld [vmem:[%s3 + $0x108] sm:$0xff]
    %v559 = vld [vmem:[%s3 + $0x110] sm:$0xff]
    %v560 = vld [vmem:[%s3 + $0x118] sm:$0xff]
    %v561 = vld [vmem:[%s3 + $0x120] sm:$0xff]
    %v562 = vld [vmem:[%s3 + $0x128] sm:$0xff]
    %v563 = vld [vmem:[%s3 + $0x130] sm:$0xff]
    %v564 = vld [vmem:[%s3 + $0x138] sm:$0xff]
    %v565 = vld [vmem:[%s3 + $0x140] sm:$0xff]
    %v566 = vld [vmem:[%s3 + $0x148] sm:$0xff]
    %v567 = vld [vmem:[%s3 + $0x150] sm:$0xff]
    %v568 = vld [vmem:[%s3 + $0x158] sm:$0xff]
    %v569 = vld [vmem:[%s3 + $0x160] sm:$0xff]
    %v570 = vld [vmem:[%s3 + $0x168] sm:$0xff]
    %v571 = vld [vmem:[%s3 + $0x170] sm:$0xff]
    %v572 = vld [vmem:[%s3 + $0x178] sm:$0xff]
    %v574 = vsel %vm377, %v359, 0
    %576 = vmatprep.subr.mxu0 0.0
    %577 = vmatpush1.msra.mxu0 0.0
    %578 = vmatprep.subr.mxu0 0.0
    %579 = vmatpush1.msra.mxu0 0.0
    %580 = vmatprep.subr.mxu0 0.0
    %581 = vmatpush1.msra.mxu0 0.0
    %582 = vmatprep.subr.mxu0 0.0
    %583 = vmatpush1.msra.mxu0 0.0
    %584 = vmatprep.subr.mxu0 0.0
    %585 = vmatpush1.msra.mxu0 0.0
    %586 = vmatprep.subr.mxu0 0.0
    %587 = vmatpush1.msra.mxu0 0.0
    %588 = vmatprep.subr.mxu0 0.0
    %589 = vmatpush1.msra.mxu0 0.0
    %590 = vmatprep.subr.mxu0 0.0
    %591 = vmatpush1.msra.mxu0 0.0
    %592 = vmatprep.subr.mxu0 %v572
    %593 = vmatpush1.msra.mxu0 %v571
    %594 = vmatprep.subr.mxu0 %v570
    %595 = vmatpush1.msra.mxu0 %v569
    %596 = vmatprep.subr.mxu0 %v568
    %597 = vmatpush1.msra.mxu0 %v567
    %598 = vmatprep.subr.mxu0 %v566
    %599 = vmatpush1.msra.mxu0 %v565
    %600 = vmatprep.subr.mxu0 %v564
    %601 = vmatpush1.msra.mxu0 %v563
    %602 = vmatprep.subr.mxu0 %v562
    %603 = vmatpush1.msra.mxu0 %v561
    %604 = vmatprep.subr.mxu0 %v560
    %605 = vmatpush1.msra.mxu0 %v559
    %606 = vmatprep.subr.mxu0 %v558
    %607 = vmatpush1.msra.mxu0 %v557
    %608 = vmatprep.subr.mxu0 0.0
    %609 = vmatpush2.msra.mxu0 0.0
    %610 = vmatprep.subr.mxu0 0.0
    %611 = vmatpush2.msra.mxu0 0.0
    %612 = vmatprep.subr.mxu0 0.0
    %613 = vmatpush2.msra.mxu0 0.0
    %614 = vmatprep.subr.mxu0 0.0
    %615 = vmatpush2.msra.mxu0 0.0
    %616 = vmatprep.subr.mxu0 0.0
    %617 = vmatpush2.msra.mxu0 0.0
    %618 = vmatprep.subr.mxu0 0.0
    %619 = vmatpush2.msra.mxu0 0.0
    %620 = vmatprep.subr.mxu0 0.0
    %621 = vmatpush2.msra.mxu0 0.0
    %622 = vmatprep.subr.mxu0 0.0
    %623 = vmatpush2.msra.mxu0 0.0
    %624 = vmatprep.subr.mxu0 0.0
    %625 = vmatpush2.msra.mxu0 0.0
    %626 = vmatprep.subr.mxu0 0.0
    %627 = vmatpush2.msra.mxu0 0.0
    %628 = vmatprep.subr.mxu0 0.0
    %629 = vmatpush2.msra.mxu0 0.0
    %630 = vmatprep.subr.mxu0 0.0
    %631 = vmatpush2.msra.mxu0 0.0
    %632 = vmatprep.subr.mxu0 0.0
    %633 = vmatpush2.msra.mxu0 0.0
    %634 = vmatprep.subr.mxu0 0.0
    %635 = vmatpush2.msra.mxu0 0.0
    %636 = vmatprep.subr.mxu0 0.0
    %637 = vmatpush2.msra.mxu0 0.0
    %638 = vmatprep.subr.mxu0 0.0
    %639 = vmatpush2.msra.mxu0 0.0
    %640 = vmatprep.mubr.f32.mxu0 0.0
    %641 = vmatmul.mubr.f32.gmra.mxu0 %v574
    %v642 = vpop.f32.mrf.mxu0
    %v643 = vadd.f32 0.0, %v642
    %v644 = vpop.f32.mrf.mxu0
    %v645 = vadd.f32 0.0, %v644
    %646 = vdwg.mxu0
    %v647 = vadd.f32 %v555, %v643
    %v648 = vadd.f32 %v556, %v645
    %v649 = vld [vmem:[%s3 + $0x180] sm:$0xff]
    %v650 = vld [vmem:[%s3 + $0x188] sm:$0xff]
    %v651 = vld [vmem:[%s3 + $0x190] sm:$0xff]
    %v652 = vld [vmem:[%s3 + $0x198] sm:$0xff]
    %v653 = vld [vmem:[%s3 + $0x1a0] sm:$0xff]
    %v654 = vld [vmem:[%s3 + $0x1a8] sm:$0xff]
    %v655 = vld [vmem:[%s3 + $0x1b0] sm:$0xff]
    %v656 = vld [vmem:[%s3 + $0x1b8] sm:$0xff]
    %v657 = vld [vmem:[%s3 + $0x1c0] sm:$0xff]
    %v658 = vld [vmem:[%s3 + $0x1c8] sm:$0xff]
    %v659 = vld [vmem:[%s3 + $0x1d0] sm:$0xff]
    %v660 = vld [vmem:[%s3 + $0x1d8] sm:$0xff]
    %v661 = vld [vmem:[%s3 + $0x1e0] sm:$0xff]
    %v662 = vld [vmem:[%s3 + $0x1e8] sm:$0xff]
    %v663 = vld [vmem:[%s3 + $0x1f0] sm:$0xff]
    %v664 = vld [vmem:[%s3 + $0x1f8] sm:$0xff]
    %v665 = vrot.slane %v359, 4
    %v666 = vsel %vm377, %v665, 0
    %668 = vmatprep.subr.mxu0 0.0
    %669 = vmatpush1.msra.mxu0 0.0
    %670 = vmatprep.subr.mxu0 0.0
    %671 = vmatpush1.msra.mxu0 0.0
    %672 = vmatprep.subr.mxu0 0.0
    %673 = vmatpush1.msra.mxu0 0.0
    %674 = vmatprep.subr.mxu0 0.0
    %675 = vmatpush1.msra.mxu0 0.0
    %676 = vmatprep.subr.mxu0 0.0
    %677 = vmatpush1.msra.mxu0 0.0
    %678 = vmatprep.subr.mxu0 0.0
    %679 = vmatpush1.msra.mxu0 0.0
    %680 = vmatprep.subr.mxu0 0.0
    %681 = vmatpush1.msra.mxu0 0.0
    %682 = vmatprep.subr.mxu0 0.0
    %683 = vmatpush1.msra.mxu0 0.0
    %684 = vmatprep.subr.mxu0 %v664
    %685 = vmatpush1.msra.mxu0 %v663
    %686 = vmatprep.subr.mxu0 %v662
    %687 = vmatpush1.msra.mxu0 %v661
    %688 = vmatprep.subr.mxu0 %v660
    %689 = vmatpush1.msra.mxu0 %v659
    %690 = vmatprep.subr.mxu0 %v658
    %691 = vmatpush1.msra.mxu0 %v657
    %692 = vmatprep.subr.mxu0 %v656
    %693 = vmatpush1.msra.mxu0 %v655
    %694 = vmatprep.subr.mxu0 %v654
    %695 = vmatpush1.msra.mxu0 %v653
    %696 = vmatprep.subr.mxu0 %v652
    %697 = vmatpush1.msra.mxu0 %v651
    %698 = vmatprep.subr.mxu0 %v650
    %699 = vmatpush1.msra.mxu0 %v649
    %700 = vmatprep.subr.mxu0 0.0
    %701 = vmatpush2.msra.mxu0 0.0
    %702 = vmatprep.subr.mxu0 0.0
    %703 = vmatpush2.msra.mxu0 0.0
    %704 = vmatprep.subr.mxu0 0.0
    %705 = vmatpush2.msra.mxu0 0.0
    %706 = vmatprep.subr.mxu0 0.0
    %707 = vmatpush2.msra.mxu0 0.0
    %708 = vmatprep.subr.mxu0 0.0
    %709 = vmatpush2.msra.mxu0 0.0
    %710 = vmatprep.subr.mxu0 0.0
    %711 = vmatpush2.msra.mxu0 0.0
    %712 = vmatprep.subr.mxu0 0.0
    %713 = vmatpush2.msra.mxu0 0.0
    %714 = vmatprep.subr.mxu0 0.0
    %715 = vmatpush2.msra.mxu0 0.0
    %716 = vmatprep.subr.mxu0 0.0
    %717 = vmatpush2.msra.mxu0 0.0
    %718 = vmatprep.subr.mxu0 0.0
    %719 = vmatpush2.msra.mxu0 0.0
    %720 = vmatprep.subr.mxu0 0.0
    %721 = vmatpush2.msra.mxu0 0.0
    %722 = vmatprep.subr.mxu0 0.0
    %723 = vmatpush2.msra.mxu0 0.0
    %724 = vmatprep.subr.mxu0 0.0
    %725 = vmatpush2.msra.mxu0 0.0
    %726 = vmatprep.subr.mxu0 0.0
    %727 = vmatpush2.msra.mxu0 0.0
    %728 = vmatprep.subr.mxu0 0.0
    %729 = vmatpush2.msra.mxu0 0.0
    %730 = vmatprep.subr.mxu0 0.0
    %731 = vmatpush2.msra.mxu0 0.0
    %732 = vmatprep.mubr.f32.mxu0 0.0
    %733 = vmatmul.mubr.f32.gmra.mxu0 %v666
    %v734 = vpop.f32.mrf.mxu0
    %v735 = vadd.f32 0.0, %v734
    %v736 = vpop.f32.mrf.mxu0
    %v737 = vadd.f32 0.0, %v736
    %738 = vdwg.mxu0
    %v739 = vadd.f32 %v647, %v735
    %v740 = vadd.f32 %v648, %v737
    %v741 = vmax.f32 %v739, 0.0
    %v742 = vmax.f32 %v740, 0.0
    %v743 = vld [vmem:[%s5] sm:$0xff]
    %v744 = vld [vmem:[%s5 + $0x8] sm:$0xff]
    %v745 = vld [vmem:[%s5 + $0x10] sm:$0xff]
    %v746 = vld [vmem:[%s5 + $0x18] sm:$0xff]
    %v747 = vld [vmem:[%s5 + $0x20] sm:$0xff]
    %v748 = vld [vmem:[%s5 + $0x28] sm:$0xff]
    %v749 = vld [vmem:[%s5 + $0x30] sm:$0xff]
    %v750 = vld [vmem:[%s5 + $0x38] sm:$0xff]
    %v751 = vld [vmem:[%s5 + $0x40] sm:$0xff]
    %v752 = vld [vmem:[%s5 + $0x48] sm:$0xff]
    %v753 = vld [vmem:[%s5 + $0x50] sm:$0xff]
    %v754 = vld [vmem:[%s5 + $0x58] sm:$0xff]
    %v755 = vld [vmem:[%s5 + $0x60] sm:$0xff]
    %v756 = vld [vmem:[%s5 + $0x68] sm:$0xff]
    %v757 = vld [vmem:[%s5 + $0x70] sm:$0xff]
    %v758 = vld [vmem:[%s5 + $0x78] sm:$0xff]
    %v759 = vld [vmem:[%s5 + $0x80] sm:$0xff]
    %v760 = vld [vmem:[%s5 + $0x88] sm:$0xff]
    %v761 = vld [vmem:[%s5 + $0x90] sm:$0xff]
    %v762 = vld [vmem:[%s5 + $0x98] sm:$0xff]
    %v763 = vld [vmem:[%s5 + $0xa0] sm:$0xff]
    %v764 = vld [vmem:[%s5 + $0xa8] sm:$0xff]
    %v765 = vld [vmem:[%s5 + $0xb0] sm:$0xff]
    %v766 = vld [vmem:[%s5 + $0xb8] sm:$0xff]
    %v767 = vld [vmem:[%s5 + $0xc0] sm:$0xff]
    %v768 = vld [vmem:[%s6] sm:$0x1]
    %v770 = vlaneseq
    %v771 = vshrl.u32 %v770, 7
    %v772 = vsub.s32 0, %v771
    %v773 = vrot.slane %v768, %v772
    %vm775 = vcmask 588800
    %v777 = vsel %vm775, %v742, 0
    %779 = vmatprep.subr.mxu0 0.0
    %780 = vmatpush1.msra.mxu0 %v758
    %781 = vmatprep.subr.mxu0 0.0
    %782 = vmatpush1.msra.mxu0 %v757
    %783 = vmatprep.subr.mxu0 0.0
    %784 = vmatpush1.msra.mxu0 %v756
    %785 = vmatprep.subr.mxu0 0.0
    %786 = vmatpush1.msra.mxu0 %v755
    %787 = vmatprep.subr.mxu0 0.0
    %788 = vmatpush1.msra.mxu0 %v754
    %789 = vmatprep.subr.mxu0 0.0
    %790 = vmatpush1.msra.mxu0 %v753
    %791 = vmatprep.subr.mxu0 0.0
    %792 = vmatpush1.msra.mxu0 %v752
    %793 = vmatprep.subr.mxu0 0.0
    %794 = vmatpush1.msra.mxu0 %v751
    %795 = vmatprep.subr.mxu0 0.0
    %796 = vmatpush1.msra.mxu0 %v750
    %797 = vmatprep.subr.mxu0 0.0
    %798 = vmatpush1.msra.mxu0 %v749
    %799 = vmatprep.subr.mxu0 0.0
    %800 = vmatpush1.msra.mxu0 %v748
    %801 = vmatprep.subr.mxu0 0.0
    %802 = vmatpush1.msra.mxu0 %v747
    %803 = vmatprep.subr.mxu0 0.0
    %804 = vmatpush1.msra.mxu0 %v746
    %805 = vmatprep.subr.mxu0 0.0
    %806 = vmatpush1.msra.mxu0 %v745
    %807 = vmatprep.subr.mxu0 0.0
    %808 = vmatpush1.msra.mxu0 %v744
    %809 = vmatprep.subr.mxu0 0.0
    %810 = vmatpush1.msra.mxu0 %v743
    %811 = vmatprep.subr.mxu0 0.0
    %812 = vmatpush2.msra.mxu0 0.0
    %813 = vmatprep.subr.mxu0 0.0
    %814 = vmatpush2.msra.mxu0 0.0
    %815 = vmatprep.subr.mxu0 0.0
    %816 = vmatpush2.msra.mxu0 0.0
    %817 = vmatprep.subr.mxu0 0.0
    %818 = vmatpush2.msra.mxu0 0.0
    %819 = vmatprep.subr.mxu0 0.0
    %820 = vmatpush2.msra.mxu0 0.0
    %821 = vmatprep.subr.mxu0 0.0
    %822 = vmatpush2.msra.mxu0 0.0
    %823 = vmatprep.subr.mxu0 0.0
    %824 = vmatpush2.msra.mxu0 0.0
    %825 = vmatprep.subr.mxu0 0.0
    %826 = vmatpush2.msra.mxu0 %v767
    %827 = vmatprep.subr.mxu0 0.0
    %828 = vmatpush2.msra.mxu0 %v766
    %829 = vmatprep.subr.mxu0 0.0
    %830 = vmatpush2.msra.mxu0 %v765
    %831 = vmatprep.subr.mxu0 0.0
    %832 = vmatpush2.msra.mxu0 %v764
    %833 = vmatprep.subr.mxu0 0.0
    %834 = vmatpush2.msra.mxu0 %v763
    %835 = vmatprep.subr.mxu0 0.0
    %836 = vmatpush2.msra.mxu0 %v762
    %837 = vmatprep.subr.mxu0 0.0
    %838 = vmatpush2.msra.mxu0 %v761
    %839 = vmatprep.subr.mxu0 0.0
    %840 = vmatpush2.msra.mxu0 %v760
    %841 = vmatprep.subr.mxu0 0.0
    %842 = vmatpush2.msra.mxu0 %v759
    %843 = vmatprep.mubr.f32.mxu0 %v777
    %844 = vmatmul.mubr.f32.gmra.mxu0 %v741
    %v845 = vpop.f32.mrf.mxu0
    %v846 = vadd.f32 %v773, %v845
    %v847 = vpop.f32.mrf.mxu0
    %848 = vdwg.mxu0
    %vm849 = vcmask 76800
    %850 = vst.msk [vmem:[%s14] sm:$0xf] %vm849, %v846
    %v851 = vld [vmem:[%s7] sm:$0xff]
    %v852 = vld [vmem:[%s7 + $0x8] sm:$0xff]
    %v853 = vld [vmem:[%s7 + $0x10] sm:$0xff]
    %v854 = vld [vmem:[%s7 + $0x18] sm:$0x3]
    %v855 = vld [vmem:[%s7 + $0x20] sm:$0x3]
    %v856 = vld [vmem:[%s7 + $0x28] sm:$0x3]
    %v857 = vld [vmem:[%s8] sm:$0xff]
    %v858 = vld [vmem:[%s8 + $0x8] sm:$0xff]
    %v859 = vld [vmem:[%s8 + $0x10] sm:$0xff]
    %v860 = vld [vmem:[%s8 + $0x18] sm:$0x3]
    %v861 = vld [vmem:[%s8 + $0x20] sm:$0x3]
    %v862 = vld [vmem:[%s8 + $0x28] sm:$0x3]
    %v864 = vrot.slane %v846, 2
    %vm865 = vcmask 80896
    %v866 = vsel %vm865, %v864, 0
    %vm868 = vcmask 1041408
    %v870 = vsel %vm868, %v860, 0
    %v873 = vsel %vm868, %v861, 0
    %v876 = vsel %vm868, %v862, 0
    %878 = vmatprep.subr.mxu0 0.0
    %879 = vmatpush1.msra.mxu0 0.0
    %880 = vmatprep.subr.mxu0 0.0
    %881 = vmatpush1.msra.mxu0 0.0
    %882 = vmatprep.subr.mxu0 0.0
    %883 = vmatpush1.msra.mxu0 0.0
    %884 = vmatprep.subr.mxu0 0.0
    %885 = vmatpush1.msra.mxu0 0.0
    %886 = vmatprep.subr.mxu0 0.0
    %887 = vmatpush1.msra.mxu0 0.0
    %888 = vmatprep.subr.mxu0 0.0
    %889 = vmatpush1.msra.mxu0 0.0
    %890 = vmatprep.subr.mxu0 0.0
    %891 = vmatpush1.msra.mxu0 0.0
    %892 = vmatprep.subr.mxu0 0.0
    %893 = vmatpush1.msra.mxu0 0.0
    %894 = vmatprep.subr.mxu0 0.0
    %895 = vmatpush1.msra.mxu0 0.0
    %896 = vmatprep.subr.mxu0 0.0
    %897 = vmatpush1.msra.mxu0 0.0
    %898 = vmatprep.subr.mxu0 0.0
    %899 = vmatpush1.msra.mxu0 0.0
    %900 = vmatprep.subr.mxu0 0.0
    %901 = vmatpush1.msra.mxu0 0.0
    %902 = vmatprep.subr.mxu0 0.0
    %903 = vmatpush1.msra.mxu0 0.0
    %904 = vmatprep.subr.mxu0 0.0
    %905 = vmatpush1.msra.mxu0 0.0
    %906 = vmatprep.subr.mxu0 %v873
    %907 = vmatpush1.msra.mxu0 %v870
    %908 = vmatprep.subr.mxu0 %v858
    %909 = vmatpush1.msra.mxu0 %v857
    %910 = vmatprep.subr.mxu0 0.0
    %911 = vmatpush2.msra.mxu0 0.0
    %912 = vmatprep.subr.mxu0 0.0
    %913 = vmatpush2.msra.mxu0 0.0
    %914 = vmatprep.subr.mxu0 0.0
    %915 = vmatpush2.msra.mxu0 0.0
    %916 = vmatprep.subr.mxu0 0.0
    %917 = vmatpush2.msra.mxu0 0.0
    %918 = vmatprep.subr.mxu0 0.0
    %919 = vmatpush2.msra.mxu0 0.0
    %920 = vmatprep.subr.mxu0 0.0
    %921 = vmatpush2.msra.mxu0 0.0
    %922 = vmatprep.subr.mxu0 0.0
    %923 = vmatpush2.msra.mxu0 0.0
    %924 = vmatprep.subr.mxu0 0.0
    %925 = vmatpush2.msra.mxu0 0.0
    %926 = vmatprep.subr.mxu0 0.0
    %927 = vmatpush2.msra.mxu0 0.0
    %928 = vmatprep.subr.mxu0 0.0
    %929 = vmatpush2.msra.mxu0 0.0
    %930 = vmatprep.subr.mxu0 0.0
    %931 = vmatpush2.msra.mxu0 0.0
    %932 = vmatprep.subr.mxu0 0.0
    %933 = vmatpush2.msra.mxu0 0.0
    %934 = vmatprep.subr.mxu0 0.0
    %935 = vmatpush2.msra.mxu0 0.0
    %936 = vmatprep.subr.mxu0 0.0
    %937 = vmatpush2.msra.mxu0 0.0
    %938 = vmatprep.subr.mxu0 0.0
    %939 = vmatpush2.msra.mxu0 0.0
    %940 = vmatprep.subr.mxu0 0.0
    %941 = vmatpush2.msra.mxu0 0.0
    %942 = vmatprep.mubr.f32.mxu0 0.0
    %943 = vmatmul.mubr.f32.gmra.mxu0 %v866
    %v944 = vpop.f32.mrf.mxu0
    %v945 = vadd.f32 0.0, %v944
    %v946 = vpop.f32.mrf.mxu0
    %v947 = vadd.f32 0.0, %v946
    %948 = vdwg.mxu0
    %949 = vmatprep.subr.mxu0 0.0
    %950 = vmatpush1.msra.mxu0 0.0
    %951 = vmatprep.subr.mxu0 0.0
    %952 = vmatpush1.msra.mxu0 0.0
    %953 = vmatprep.subr.mxu0 0.0
    %954 = vmatpush1.msra.mxu0 0.0
    %955 = vmatprep.subr.mxu0 0.0
    %956 = vmatpush1.msra.mxu0 0.0
    %957 = vmatprep.subr.mxu0 0.0
    %958 = vmatpush1.msra.mxu0 0.0
    %959 = vmatprep.subr.mxu0 0.0
    %960 = vmatpush1.msra.mxu0 0.0
    %961 = vmatprep.subr.mxu0 0.0
    %962 = vmatpush1.msra.mxu0 0.0
    %963 = vmatprep.subr.mxu0 0.0
    %964 = vmatpush1.msra.mxu0 0.0
    %965 = vmatprep.subr.mxu0 0.0
    %966 = vmatpush1.msra.mxu0 0.0
    %967 = vmatprep.subr.mxu0 0.0
    %968 = vmatpush1.msra.mxu0 0.0
    %969 = vmatprep.subr.mxu0 0.0
    %970 = vmatpush1.msra.mxu0 0.0
    %971 = vmatprep.subr.mxu0 0.0
    %972 = vmatpush1.msra.mxu0 0.0
    %973 = vmatprep.subr.mxu0 0.0
    %974 = vmatpush1.msra.mxu0 0.0
    %975 = vmatprep.subr.mxu0 0.0
    %976 = vmatpush1.msra.mxu0 0.0
    %977 = vmatprep.subr.mxu0 0.0
    %978 = vmatpush1.msra.mxu0 %v876
    %979 = vmatprep.subr.mxu0 0.0
    %980 = vmatpush1.msra.mxu0 %v859
    %981 = vmatprep.subr.mxu0 0.0
    %982 = vmatpush2.msra.mxu0 0.0
    %983 = vmatprep.subr.mxu0 0.0
    %984 = vmatpush2.msra.mxu0 0.0
    %985 = vmatprep.subr.mxu0 0.0
    %986 = vmatpush2.msra.mxu0 0.0
    %987 = vmatprep.subr.mxu0 0.0
    %988 = vmatpush2.msra.mxu0 0.0
    %989 = vmatprep.subr.mxu0 0.0
    %990 = vmatpush2.msra.mxu0 0.0
    %991 = vmatprep.subr.mxu0 0.0
    %992 = vmatpush2.msra.mxu0 0.0
    %993 = vmatprep.subr.mxu0 0.0
    %994 = vmatpush2.msra.mxu0 0.0
    %995 = vmatprep.subr.mxu0 0.0
    %996 = vmatpush2.msra.mxu0 0.0
    %997 = vmatprep.subr.mxu0 0.0
    %998 = vmatpush2.msra.mxu0 0.0
    %999 = vmatprep.subr.mxu0 0.0
    %1000 = vmatpush2.msra.mxu0 0.0
    %1001 = vmatprep.subr.mxu0 0.0
    %1002 = vmatpush2.msra.mxu0 0.0
    %1003 = vmatprep.subr.mxu0 0.0
    %1004 = vmatpush2.msra.mxu0 0.0
    %1005 = vmatprep.subr.mxu0 0.0
    %1006 = vmatpush2.msra.mxu0 0.0
    %1007 = vmatprep.subr.mxu0 0.0
    %1008 = vmatpush2.msra.mxu0 0.0
    %1009 = vmatprep.subr.mxu0 0.0
    %1010 = vmatpush2.msra.mxu0 0.0
    %1011 = vmatprep.subr.mxu0 0.0
    %1012 = vmatpush2.msra.mxu0 0.0
    %1013 = vmatprep.mubr.f32.mxu0 0.0
    %1014 = vmatmul.mubr.f32.gmra.mxu0 %v866
    %v1015 = vpop.f32.mrf.mxu0
    %v1016 = vadd.f32 0.0, %v1015
    %v1017 = vpop.f32.mrf.mxu0
    %1018 = vdwg.mxu0
    %v1019 = vsel %vm865, %v846, 0
    %v1022 = vsel %vm868, %v854, 0
    %v1025 = vsel %vm868, %v855, 0
    %v1028 = vsel %vm868, %v856, 0
    %1030 = vmatprep.subr.mxu0 0.0
    %1031 = vmatpush1.msra.mxu0 0.0
    %1032 = vmatprep.subr.mxu0 0.0
    %1033 = vmatpush1.msra.mxu0 0.0
    %1034 = vmatprep.subr.mxu0 0.0
    %1035 = vmatpush1.msra.mxu0 0.0
    %1036 = vmatprep.subr.mxu0 0.0
    %1037 = vmatpush1.msra.mxu0 0.0
    %1038 = vmatprep.subr.mxu0 0.0
    %1039 = vmatpush1.msra.mxu0 0.0
    %1040 = vmatprep.subr.mxu0 0.0
    %1041 = vmatpush1.msra.mxu0 0.0
    %1042 = vmatprep.subr.mxu0 0.0
    %1043 = vmatpush1.msra.mxu0 0.0
    %1044 = vmatprep.subr.mxu0 0.0
    %1045 = vmatpush1.msra.mxu0 0.0
    %1046 = vmatprep.subr.mxu0 0.0
    %1047 = vmatpush1.msra.mxu0 0.0
    %1048 = vmatprep.subr.mxu0 0.0
    %1049 = vmatpush1.msra.mxu0 0.0
    %1050 = vmatprep.subr.mxu0 0.0
    %1051 = vmatpush1.msra.mxu0 0.0
    %1052 = vmatprep.subr.mxu0 0.0
    %1053 = vmatpush1.msra.mxu0 0.0
    %1054 = vmatprep.subr.mxu0 0.0
    %1055 = vmatpush1.msra.mxu0 0.0
    %1056 = vmatprep.subr.mxu0 0.0
    %1057 = vmatpush1.msra.mxu0 0.0
    %1058 = vmatprep.subr.mxu0 %v1025
    %1059 = vmatpush1.msra.mxu0 %v1022
    %1060 = vmatprep.subr.mxu0 %v852
    %1061 = vmatpush1.msra.mxu0 %v851
    %1062 = vmatprep.subr.mxu0 0.0
    %1063 = vmatpush2.msra.mxu0 0.0
    %1064 = vmatprep.subr.mxu0 0.0
    %1065 = vmatpush2.msra.mxu0 0.0
    %1066 = vmatprep.subr.mxu0 0.0
    %1067 = vmatpush2.msra.mxu0 0.0
    %1068 = vmatprep.subr.mxu0 0.0
    %1069 = vmatpush2.msra.mxu0 0.0
    %1070 = vmatprep.subr.mxu0 0.0
    %1071 = vmatpush2.msra.mxu0 0.0
    %1072 = vmatprep.subr.mxu0 0.0
    %1073 = vmatpush2.msra.mxu0 0.0
    %1074 = vmatprep.subr.mxu0 0.0
    %1075 = vmatpush2.msra.mxu0 0.0
    %1076 = vmatprep.subr.mxu0 0.0
    %1077 = vmatpush2.msra.mxu0 0.0
    %1078 = vmatprep.subr.mxu0 0.0
    %1079 = vmatpush2.msra.mxu0 0.0
    %1080 = vmatprep.subr.mxu0 0.0
    %1081 = vmatpush2.msra.mxu0 0.0
    %1082 = vmatprep.subr.mxu0 0.0
    %1083 = vmatpush2.msra.mxu0 0.0
    %1084 = vmatprep.subr.mxu0 0.0
    %1085 = vmatpush2.msra.mxu0 0.0
    %1086 = vmatprep.subr.mxu0 0.0
    %1087 = vmatpush2.msra.mxu0 0.0
    %1088 = vmatprep.subr.mxu0 0.0
    %1089 = vmatpush2.msra.mxu0 0.0
    %1090 = vmatprep.subr.mxu0 0.0
    %1091 = vmatpush2.msra.mxu0 0.0
    %1092 = vmatprep.subr.mxu0 0.0
    %1093 = vmatpush2.msra.mxu0 0.0
    %1094 = vmatprep.mubr.f32.mxu0 0.0
    %1095 = vmatmul.mubr.f32.gmra.mxu0 %v1019
    %v1096 = vpop.f32.mrf.mxu0
    %v1097 = vadd.f32 %v945, %v1096
    %v1098 = vpop.f32.mrf.mxu0
    %v1099 = vadd.f32 %v947, %v1098
    %1100 = vdwg.mxu0
    %1101 = vmatprep.subr.mxu0 0.0
    %1102 = vmatpush1.msra.mxu0 0.0
    %1103 = vmatprep.subr.mxu0 0.0
    %1104 = vmatpush1.msra.mxu0 0.0
    %1105 = vmatprep.subr.mxu0 0.0
    %1106 = vmatpush1.msra.mxu0 0.0
    %1107 = vmatprep.subr.mxu0 0.0
    %1108 = vmatpush1.msra.mxu0 0.0
    %1109 = vmatprep.subr.mxu0 0.0
    %1110 = vmatpush1.msra.mxu0 0.0
    %1111 = vmatprep.subr.mxu0 0.0
    %1112 = vmatpush1.msra.mxu0 0.0
    %1113 = vmatprep.subr.mxu0 0.0
    %1114 = vmatpush1.msra.mxu0 0.0
    %1115 = vmatprep.subr.mxu0 0.0
    %1116 = vmatpush1.msra.mxu0 0.0
    %1117 = vmatprep.subr.mxu0 0.0
    %1118 = vmatpush1.msra.mxu0 0.0
    %1119 = vmatprep.subr.mxu0 0.0
    %1120 = vmatpush1.msra.mxu0 0.0
    %1121 = vmatprep.subr.mxu0 0.0
    %1122 = vmatpush1.msra.mxu0 0.0
    %1123 = vmatprep.subr.mxu0 0.0
    %1124 = vmatpush1.msra.mxu0 0.0
    %1125 = vmatprep.subr.mxu0 0.0
    %1126 = vmatpush1.msra.mxu0 0.0
    %1127 = vmatprep.subr.mxu0 0.0
    %1128 = vmatpush1.msra.mxu0 0.0
    %1129 = vmatprep.subr.mxu0 0.0
    %1130 = vmatpush1.msra.mxu0 %v1028
    %1131 = vmatprep.subr.mxu0 0.0
    %1132 = vmatpush1.msra.mxu0 %v853
    %1133 = vmatprep.subr.mxu0 0.0
    %1134 = vmatpush2.msra.mxu0 0.0
    %1135 = vmatprep.subr.mxu0 0.0
    %1136 = vmatpush2.msra.mxu0 0.0
    %1137 = vmatprep.subr.mxu0 0.0
    %1138 = vmatpush2.msra.mxu0 0.0
    %1139 = vmatprep.subr.mxu0 0.0
    %1140 = vmatpush2.msra.mxu0 0.0
    %1141 = vmatprep.subr.mxu0 0.0
    %1142 = vmatpush2.msra.mxu0 0.0
    %1143 = vmatprep.subr.mxu0 0.0
    %1144 = vmatpush2.msra.mxu0 0.0
    %1145 = vmatprep.subr.mxu0 0.0
    %1146 = vmatpush2.msra.mxu0 0.0
    %1147 = vmatprep.subr.mxu0 0.0
    %1148 = vmatpush2.msra.mxu0 0.0
    %1149 = vmatprep.subr.mxu0 0.0
    %1150 = vmatpush2.msra.mxu0 0.0
    %1151 = vmatprep.subr.mxu0 0.0
    %1152 = vmatpush2.msra.mxu0 0.0
    %1153 = vmatprep.subr.mxu0 0.0
    %1154 = vmatpush2.msra.mxu0 0.0
    %1155 = vmatprep.subr.mxu0 0.0
    %1156 = vmatpush2.msra.mxu0 0.0
    %1157 = vmatprep.subr.mxu0 0.0
    %1158 = vmatpush2.msra.mxu0 0.0
    %1159 = vmatprep.subr.mxu0 0.0
    %1160 = vmatpush2.msra.mxu0 0.0
    %1161 = vmatprep.subr.mxu0 0.0
    %1162 = vmatpush2.msra.mxu0 0.0
    %1163 = vmatprep.subr.mxu0 0.0
    %1164 = vmatpush2.msra.mxu0 0.0
    %1165 = vmatprep.mubr.f32.mxu0 0.0
    %1166 = vmatmul.mubr.f32.gmra.mxu0 %v1019
    %v1167 = vpop.f32.mrf.mxu0
    %v1168 = vadd.f32 %v1016, %v1167
    %v1169 = vpop.f32.mrf.mxu0
    %1170 = vdwg.mxu0
    %v1171 = vld [vmem:[%s9] sm:$0x7]
    %v1173 = vlaneseq
    %v1174 = vshrl.u32 %v1173, 7
    %v1175 = vsub.s32 0, %v1174
    %v1176 = vrot.slane %v1171, %v1175
    %v1177 = vlaneseq
    %v1178 = vshrl.u32 %v1177, 7
    %v1179 = vsub.s32 1, %v1178
    %v1180 = vrot.slane %v1171, %v1179
    %v1181 = vlaneseq
    %v1182 = vshrl.u32 %v1181, 7
    %v1183 = vsub.s32 2, %v1182
    %v1184 = vrot.slane %v1171, %v1183
    %v1188 = vadd.f32 %v1097, %v1176
    %v1189 = vadd.f32 %v1099, %v1180
    %v1190 = vadd.f32 %v1168, %v1184
    %v1191 = vmax.f32 %v1188, 0.0
    %v1192 = vmax.f32 %v1189, 0.0
    %v1193 = vmax.f32 %v1190, 0.0
    %v1194 = vld [vmem:[%s10] sm:$0xff]
    %v1195 = vld [vmem:[%s10 + $0x8] sm:$0xff]
    %v1196 = vld [vmem:[%s10 + $0x10] sm:$0xff]
    %v1197 = vld [vmem:[%s10 + $0x18] sm:$0xff]
    %v1198 = vld [vmem:[%s10 + $0x20] sm:$0xff]
    %v1199 = vld [vmem:[%s10 + $0x28] sm:$0xff]
    %v1200 = vld [vmem:[%s10 + $0x30] sm:$0xff]
    %v1201 = vld [vmem:[%s10 + $0x38] sm:$0xff]
    %v1202 = vld [vmem:[%s10 + $0x40] sm:$0xff]
    %v1203 = vld [vmem:[%s10 + $0x48] sm:$0xff]
    %v1204 = vld [vmem:[%s10 + $0x50] sm:$0xff]
    %v1205 = vld [vmem:[%s10 + $0x58] sm:$0xff]
    %v1206 = vld [vmem:[%s10 + $0x60] sm:$0xff]
    %v1207 = vld [vmem:[%s10 + $0x68] sm:$0xff]
    %v1208 = vld [vmem:[%s10 + $0x70] sm:$0xff]
    %v1209 = vld [vmem:[%s10 + $0x78] sm:$0xff]
    %v1210 = vld [vmem:[%s10 + $0x80] sm:$0xff]
    %v1211 = vld [vmem:[%s10 + $0x88] sm:$0xff]
    %v1212 = vld [vmem:[%s10 + $0x90] sm:$0xff]
    %v1213 = vld [vmem:[%s10 + $0x98] sm:$0xff]
    %v1214 = vld [vmem:[%s10 + $0xa0] sm:$0xff]
    %v1215 = vld [vmem:[%s10 + $0xa8] sm:$0xff]
    %v1216 = vld [vmem:[%s10 + $0xb0] sm:$0xff]
    %v1217 = vld [vmem:[%s10 + $0xb8] sm:$0xff]
    %v1218 = vld [vmem:[%s10 + $0xc0] sm:$0xff]
    %v1219 = vld [vmem:[%s10 + $0xc8] sm:$0xff]
    %v1220 = vld [vmem:[%s10 + $0xd0] sm:$0xff]
    %v1221 = vld [vmem:[%s10 + $0xd8] sm:$0xff]
    %v1222 = vld [vmem:[%s10 + $0xe0] sm:$0xff]
    %v1223 = vld [vmem:[%s10 + $0xe8] sm:$0xff]
    %v1224 = vld [vmem:[%s10 + $0xf0] sm:$0xff]
    %v1225 = vld [vmem:[%s10 + $0xf8] sm:$0xff]
    %v1226 = vld [vmem:[%s10 + $0x100] sm:$0xff]
    %v1227 = vld [vmem:[%s10 + $0x108] sm:$0xff]
    %v1228 = vld [vmem:[%s10 + $0x110] sm:$0xff]
    %v1229 = vld [vmem:[%s10 + $0x118] sm:$0xff]
    %v1230 = vld [vmem:[%s10 + $0x120] sm:$0xff]
    %v1231 = vld [vmem:[%s10 + $0x128] sm:$0xff]
    %v1232 = vld [vmem:[%s10 + $0x130] sm:$0xff]
    %v1233 = vld [vmem:[%s10 + $0x138] sm:$0xff]
    %v1234 = vld [vmem:[%s10 + $0x140] sm:$0xff]
    %v1235 = vld [vmem:[%s10 + $0x148] sm:$0xff]
    %v1236 = vld [vmem:[%s10 + $0x150] sm:$0xff]
    %v1237 = vld [vmem:[%s10 + $0x158] sm:$0xff]
    %v1238 = vld [vmem:[%s10 + $0x160] sm:$0xff]
    %v1239 = vld [vmem:[%s10 + $0x168] sm:$0xff]
    %v1240 = vld [vmem:[%s10 + $0x170] sm:$0xff]
    %v1241 = vld [vmem:[%s10 + $0x178] sm:$0xff]
    %v1242 = vld [vmem:[%s10 + $0x180] sm:$0xff]
    %v1243 = vld [vmem:[%s10 + $0x188] sm:$0xff]
    %v1244 = vld [vmem:[%s10 + $0x190] sm:$0xff]
    %v1245 = vld [vmem:[%s10 + $0x198] sm:$0xff]
    %v1246 = vld [vmem:[%s10 + $0x1a0] sm:$0xff]
    %v1247 = vld [vmem:[%s10 + $0x1a8] sm:$0xff]
    %v1248 = vld [vmem:[%s10 + $0x1b0] sm:$0xff]
    %v1249 = vld [vmem:[%s10 + $0x1b8] sm:$0xff]
    %v1250 = vld [vmem:[%s10 + $0x1c0] sm:$0xff]
    %v1251 = vld [vmem:[%s10 + $0x1c8] sm:$0xff]
    %v1252 = vld [vmem:[%s10 + $0x1d0] sm:$0xff]
    %v1253 = vld [vmem:[%s10 + $0x1d8] sm:$0xff]
    %v1254 = vld [vmem:[%s10 + $0x1e0] sm:$0xff]
    %v1255 = vld [vmem:[%s10 + $0x1e8] sm:$0xff]
    %v1256 = vld [vmem:[%s10 + $0x1f0] sm:$0xff]
    %v1257 = vld [vmem:[%s10 + $0x1f8] sm:$0xff]
    %v1258 = vld [vmem:[%s10 + $0x200] sm:$0xff]
    %v1259 = vld [vmem:[%s10 + $0x208] sm:$0xff]
    %v1260 = vld [vmem:[%s10 + $0x210] sm:$0xff]
    %v1261 = vld [vmem:[%s10 + $0x218] sm:$0xff]
    %v1262 = vld [vmem:[%s10 + $0x220] sm:$0xff]
    %v1263 = vld [vmem:[%s10 + $0x228] sm:$0xff]
    %v1264 = vld [vmem:[%s10 + $0x230] sm:$0xff]
    %v1265 = vld [vmem:[%s10 + $0x238] sm:$0xff]
    %v1266 = vld [vmem:[%s10 + $0x240] sm:$0xff]
    %v1267 = vld [vmem:[%s10 + $0x248] sm:$0xff]
    %v1268 = vld [vmem:[%s10 + $0x250] sm:$0xff]
    %v1269 = vld [vmem:[%s10 + $0x258] sm:$0xff]
    %v1270 = vld [vmem:[%s10 + $0x260] sm:$0xff]
    %v1271 = vld [vmem:[%s10 + $0x268] sm:$0xff]
    %v1272 = vld [vmem:[%s10 + $0x270] sm:$0xff]
    %v1273 = vld [vmem:[%s10 + $0x278] sm:$0xff]
    %v1274 = vld [vmem:[%s10 + $0x280] sm:$0xff]
    %v1275 = vld [vmem:[%s10 + $0x288] sm:$0xff]
    %v1276 = vld [vmem:[%s10 + $0x290] sm:$0xff]
    %v1277 = vld [vmem:[%s10 + $0x298] sm:$0xff]
    %v1278 = vld [vmem:[%s10 + $0x2a0] sm:$0xff]
    %v1279 = vld [vmem:[%s10 + $0x2a8] sm:$0xff]
    %v1280 = vld [vmem:[%s10 + $0x2b0] sm:$0xff]
    %v1281 = vld [vmem:[%s10 + $0x2b8] sm:$0xff]
    %v1282 = vld [vmem:[%s10 + $0x2c0] sm:$0xff]
    %v1283 = vld [vmem:[%s10 + $0x2c8] sm:$0xff]
    %v1284 = vld [vmem:[%s10 + $0x2d0] sm:$0xff]
    %v1285 = vld [vmem:[%s10 + $0x2d8] sm:$0xff]
    %v1286 = vld [vmem:[%s10 + $0x2e0] sm:$0xff]
    %v1287 = vld [vmem:[%s10 + $0x2e8] sm:$0xff]
    %v1288 = vld [vmem:[%s10 + $0x2f0] sm:$0xff]
    %v1289 = vld [vmem:[%s10 + $0x2f8] sm:$0xff]
    %v1290 = vld [vmem:[%s10 + $0x300] sm:$0xff]
    %v1291 = vld [vmem:[%s10 + $0x308] sm:$0xff]
    %v1292 = vld [vmem:[%s10 + $0x310] sm:$0xff]
    %v1293 = vld [vmem:[%s10 + $0x318] sm:$0xff]
    %v1294 = vld [vmem:[%s10 + $0x320] sm:$0xff]
    %v1295 = vld [vmem:[%s10 + $0x328] sm:$0xff]
    %v1296 = vld [vmem:[%s10 + $0x330] sm:$0xff]
    %v1297 = vld [vmem:[%s10 + $0x338] sm:$0xff]
    %v1298 = vld [vmem:[%s10 + $0x340] sm:$0xff]
    %v1299 = vld [vmem:[%s10 + $0x348] sm:$0xff]
    %v1300 = vld [vmem:[%s10 + $0x350] sm:$0xff]
    %v1301 = vld [vmem:[%s10 + $0x358] sm:$0xff]
    %v1302 = vld [vmem:[%s10 + $0x360] sm:$0xff]
    %v1303 = vld [vmem:[%s10 + $0x368] sm:$0xff]
    %v1304 = vld [vmem:[%s10 + $0x370] sm:$0xff]
    %v1305 = vld [vmem:[%s10 + $0x378] sm:$0xf]
    %v1306 = vld [vmem:[%s10 + $0x380] sm:$0xf]
    %v1307 = vld [vmem:[%s10 + $0x388] sm:$0xf]
    %v1308 = vld [vmem:[%s11] sm:$0x7]
    %v1310 = vlaneseq
    %v1311 = vshrl.u32 %v1310, 7
    %v1312 = vsub.s32 0, %v1311
    %v1313 = vrot.slane %v1308, %v1312
    %v1314 = vlaneseq
    %v1315 = vshrl.u32 %v1314, 7
    %v1316 = vsub.s32 1, %v1315
    %v1317 = vrot.slane %v1308, %v1316
    %v1318 = vlaneseq
    %v1319 = vshrl.u32 %v1318, 7
    %v1320 = vsub.s32 2, %v1319
    %v1321 = vrot.slane %v1308, %v1320
    %vm1325 = vcmask 359424
    %v1327 = vsel %vm1325, %v1193, 0
    %vm1329 = vcmask 1043456
    %v1331 = vsel %vm1329, %v1305, 0
    %v1334 = vsel %vm1329, %v1306, 0
    %v1337 = vsel %vm1329, %v1307, 0
    %1339 = vmatprep.subr.mxu0 %v1240
    %1340 = vmatpush1.msra.mxu0 %v1239
    %1341 = vmatprep.subr.mxu0 %v1237
    %1342 = vmatpush1.msra.mxu0 %v1236
    %1343 = vmatprep.subr.mxu0 %v1234
    %1344 = vmatpush1.msra.mxu0 %v1233
    %1345 = vmatprep.subr.mxu0 %v1231
    %1346 = vmatpush1.msra.mxu0 %v1230
    %1347 = vmatprep.subr.mxu0 %v1228
    %1348 = vmatpush1.msra.mxu0 %v1227
    %1349 = vmatprep.subr.mxu0 %v1225
    %1350 = vmatpush1.msra.mxu0 %v1224
    %1351 = vmatprep.subr.mxu0 %v1222
    %1352 = vmatpush1.msra.mxu0 %v1221
    %1353 = vmatprep.subr.mxu0 %v1219
    %1354 = vmatpush1.msra.mxu0 %v1218
    %1355 = vmatprep.subr.mxu0 %v1216
    %1356 = vmatpush1.msra.mxu0 %v1215
    %1357 = vmatprep.subr.mxu0 %v1213
    %1358 = vmatpush1.msra.mxu0 %v1212
    %1359 = vmatprep.subr.mxu0 %v1210
    %1360 = vmatpush1.msra.mxu0 %v1209
    %1361 = vmatprep.subr.mxu0 %v1207
    %1362 = vmatpush1.msra.mxu0 %v1206
    %1363 = vmatprep.subr.mxu0 %v1204
    %1364 = vmatpush1.msra.mxu0 %v1203
    %1365 = vmatprep.subr.mxu0 %v1201
    %1366 = vmatpush1.msra.mxu0 %v1200
    %1367 = vmatprep.subr.mxu0 %v1198
    %1368 = vmatpush1.msra.mxu0 %v1197
    %1369 = vmatprep.subr.mxu0 %v1195
    %1370 = vmatpush1.msra.mxu0 %v1194
    %1371 = vmatprep.subr.mxu0 %v1288
    %1372 = vmatpush2.msra.mxu0 %v1287
    %1373 = vmatprep.subr.mxu0 %v1285
    %1374 = vmatpush2.msra.mxu0 %v1284
    %1375 = vmatprep.subr.mxu0 %v1282
    %1376 = vmatpush2.msra.mxu0 %v1281
    %1377 = vmatprep.subr.mxu0 %v1279
    %1378 = vmatpush2.msra.mxu0 %v1278
    %1379 = vmatprep.subr.mxu0 %v1276
    %1380 = vmatpush2.msra.mxu0 %v1275
    %1381 = vmatprep.subr.mxu0 %v1273
    %1382 = vmatpush2.msra.mxu0 %v1272
    %1383 = vmatprep.subr.mxu0 %v1270
    %1384 = vmatpush2.msra.mxu0 %v1269
    %1385 = vmatprep.subr.mxu0 %v1267
    %1386 = vmatpush2.msra.mxu0 %v1266
    %1387 = vmatprep.subr.mxu0 %v1264
    %1388 = vmatpush2.msra.mxu0 %v1263
    %1389 = vmatprep.subr.mxu0 %v1261
    %1390 = vmatpush2.msra.mxu0 %v1260
    %1391 = vmatprep.subr.mxu0 %v1258
    %1392 = vmatpush2.msra.mxu0 %v1257
    %1393 = vmatprep.subr.mxu0 %v1255
    %1394 = vmatpush2.msra.mxu0 %v1254
    %1395 = vmatprep.subr.mxu0 %v1252
    %1396 = vmatpush2.msra.mxu0 %v1251
    %1397 = vmatprep.subr.mxu0 %v1249
    %1398 = vmatpush2.msra.mxu0 %v1248
    %1399 = vmatprep.subr.mxu0 %v1246
    %1400 = vmatpush2.msra.mxu0 %v1245
    %1401 = vmatprep.subr.mxu0 %v1243
    %1402 = vmatpush2.msra.mxu0 %v1242
    %1403 = vmatprep.mubr.f32.mxu0 %v1192
    %1404 = vmatmul.mubr.f32.gmra.mxu0 %v1191
    %v1405 = vpop.f32.mrf.mxu0
    %v1406 = vadd.f32 %v1313, %v1405
    %v1407 = vpop.f32.mrf.mxu0
    %v1408 = vadd.f32 %v1317, %v1407
    %1409 = vdwg.mxu0
    %1410 = vmatprep.subr.mxu0 0.0
    %1411 = vmatpush1.msra.mxu0 0.0
    %1412 = vmatprep.subr.mxu0 0.0
    %1413 = vmatpush1.msra.mxu0 0.0
    %1414 = vmatprep.subr.mxu0 0.0
    %1415 = vmatpush1.msra.mxu0 0.0
    %1416 = vmatprep.subr.mxu0 0.0
    %1417 = vmatpush1.msra.mxu0 0.0
    %1418 = vmatprep.subr.mxu0 0.0
    %1419 = vmatpush1.msra.mxu0 0.0
    %1420 = vmatprep.subr.mxu0 0.0
    %1421 = vmatpush1.msra.mxu0 0.0
    %1422 = vmatprep.subr.mxu0 0.0
    %1423 = vmatpush1.msra.mxu0 0.0
    %1424 = vmatprep.subr.mxu0 0.0
    %1425 = vmatpush1.msra.mxu0 0.0
    %1426 = vmatprep.subr.mxu0 0.0
    %1427 = vmatpush1.msra.mxu0 0.0
    %1428 = vmatprep.subr.mxu0 0.0
    %1429 = vmatpush1.msra.mxu0 0.0
    %1430 = vmatprep.subr.mxu0 %v1334
    %1431 = vmatpush1.msra.mxu0 %v1331
    %1432 = vmatprep.subr.mxu0 %v1303
    %1433 = vmatpush1.msra.mxu0 %v1302
    %1434 = vmatprep.subr.mxu0 %v1300
    %1435 = vmatpush1.msra.mxu0 %v1299
    %1436 = vmatprep.subr.mxu0 %v1297
    %1437 = vmatpush1.msra.mxu0 %v1296
    %1438 = vmatprep.subr.mxu0 %v1294
    %1439 = vmatpush1.msra.mxu0 %v1293
    %1440 = vmatprep.subr.mxu0 %v1291
    %1441 = vmatpush1.msra.mxu0 %v1290
    %1442 = vmatprep.subr.mxu0 0.0
    %1443 = vmatpush2.msra.mxu0 0.0
    %1444 = vmatprep.subr.mxu0 0.0
    %1445 = vmatpush2.msra.mxu0 0.0
    %1446 = vmatprep.subr.mxu0 0.0
    %1447 = vmatpush2.msra.mxu0 0.0
    %1448 = vmatprep.subr.mxu0 0.0
    %1449 = vmatpush2.msra.mxu0 0.0
    %1450 = vmatprep.subr.mxu0 0.0
    %1451 = vmatpush2.msra.mxu0 0.0
    %1452 = vmatprep.subr.mxu0 0.0
    %1453 = vmatpush2.msra.mxu0 0.0
    %1454 = vmatprep.subr.mxu0 0.0
    %1455 = vmatpush2.msra.mxu0 0.0
    %1456 = vmatprep.subr.mxu0 0.0
    %1457 = vmatpush2.msra.mxu0 0.0
    %1458 = vmatprep.subr.mxu0 0.0
    %1459 = vmatpush2.msra.mxu0 0.0
    %1460 = vmatprep.subr.mxu0 0.0
    %1461 = vmatpush2.msra.mxu0 0.0
    %1462 = vmatprep.subr.mxu0 0.0
    %1463 = vmatpush2.msra.mxu0 0.0
    %1464 = vmatprep.subr.mxu0 0.0
    %1465 = vmatpush2.msra.mxu0 0.0
    %1466 = vmatprep.subr.mxu0 0.0
    %1467 = vmatpush2.msra.mxu0 0.0
    %1468 = vmatprep.subr.mxu0 0.0
    %1469 = vmatpush2.msra.mxu0 0.0
    %1470 = vmatprep.subr.mxu0 0.0
    %1471 = vmatpush2.msra.mxu0 0.0
    %1472 = vmatprep.subr.mxu0 0.0
    %1473 = vmatpush2.msra.mxu0 0.0
    %1474 = vmatprep.mubr.f32.mxu0 0.0
    %1475 = vmatmul.mubr.f32.gmra.mxu0 %v1327
    %v1476 = vpop.f32.mrf.mxu0
    %v1477 = vadd.f32 %v1406, %v1476
    %v1478 = vpop.f32.mrf.mxu0
    %v1479 = vadd.f32 %v1408, %v1478
    %1480 = vdwg.mxu0
    %1481 = vmatprep.subr.mxu0 0.0
    %1482 = vmatpush1.msra.mxu0 %v1241
    %1483 = vmatprep.subr.mxu0 0.0
    %1484 = vmatpush1.msra.mxu0 %v1238
    %1485 = vmatprep.subr.mxu0 0.0
    %1486 = vmatpush1.msra.mxu0 %v1235
    %1487 = vmatprep.subr.mxu0 0.0
    %1488 = vmatpush1.msra.mxu0 %v1232
    %1489 = vmatprep.subr.mxu0 0.0
    %1490 = vmatpush1.msra.mxu0 %v1229
    %1491 = vmatprep.subr.mxu0 0.0
    %1492 = vmatpush1.msra.mxu0 %v1226
    %1493 = vmatprep.subr.mxu0 0.0
    %1494 = vmatpush1.msra.mxu0 %v1223
    %1495 = vmatprep.subr.mxu0 0.0
    %1496 = vmatpush1.msra.mxu0 %v1220
    %1497 = vmatprep.subr.mxu0 0.0
    %1498 = vmatpush1.msra.mxu0 %v1217
    %1499 = vmatprep.subr.mxu0 0.0
    %1500 = vmatpush1.msra.mxu0 %v1214
    %1501 = vmatprep.subr.mxu0 0.0
    %1502 = vmatpush1.msra.mxu0 %v1211
    %1503 = vmatprep.subr.mxu0 0.0
    %1504 = vmatpush1.msra.mxu0 %v1208
    %1505 = vmatprep.subr.mxu0 0.0
    %1506 = vmatpush1.msra.mxu0 %v1205
    %1507 = vmatprep.subr.mxu0 0.0
    %1508 = vmatpush1.msra.mxu0 %v1202
    %1509 = vmatprep.subr.mxu0 0.0
    %1510 = vmatpush1.msra.mxu0 %v1199
    %1511 = vmatprep.subr.mxu0 0.0
    %1512 = vmatpush1.msra.mxu0 %v1196
    %1513 = vmatprep.subr.mxu0 0.0
    %1514 = vmatpush2.msra.mxu0 %v1289
    %1515 = vmatprep.subr.mxu0 0.0
    %1516 = vmatpush2.msra.mxu0 %v1286
    %1517 = vmatprep.subr.mxu0 0.0
    %1518 = vmatpush2.msra.mxu0 %v1283
    %1519 = vmatprep.subr.mxu0 0.0
    %1520 = vmatpush2.msra.mxu0 %v1280
    %1521 = vmatprep.subr.mxu0 0.0
    %1522 = vmatpush2.msra.mxu0 %v1277
    %1523 = vmatprep.subr.mxu0 0.0
    %1524 = vmatpush2.msra.mxu0 %v1274
    %1525 = vmatprep.subr.mxu0 0.0
    %1526 = vmatpush2.msra.mxu0 %v1271
    %1527 = vmatprep.subr.mxu0 0.0
    %1528 = vmatpush2.msra.mxu0 %v1268
    %1529 = vmatprep.subr.mxu0 0.0
    %1530 = vmatpush2.msra.mxu0 %v1265
    %1531 = vmatprep.subr.mxu0 0.0
    %1532 = vmatpush2.msra.mxu0 %v1262
    %1533 = vmatprep.subr.mxu0 0.0
    %1534 = vmatpush2.msra.mxu0 %v1259
    %1535 = vmatprep.subr.mxu0 0.0
    %1536 = vmatpush2.msra.mxu0 %v1256
    %1537 = vmatprep.subr.mxu0 0.0
    %1538 = vmatpush2.msra.mxu0 %v1253
    %1539 = vmatprep.subr.mxu0 0.0
    %1540 = vmatpush2.msra.mxu0 %v1250
    %1541 = vmatprep.subr.mxu0 0.0
    %1542 = vmatpush2.msra.mxu0 %v1247
    %1543 = vmatprep.subr.mxu0 0.0
    %1544 = vmatpush2.msra.mxu0 %v1244
    %1545 = vmatprep.mubr.f32.mxu0 %v1192
    %1546 = vmatmul.mubr.f32.gmra.mxu0 %v1191
    %v1547 = vpop.f32.mrf.mxu0
    %v1548 = vadd.f32 %v1321, %v1547
    %v1549 = vpop.f32.mrf.mxu0
    %1550 = vdwg.mxu0
    %1551 = vmatprep.subr.mxu0 0.0
    %1552 = vmatpush1.msra.mxu0 0.0
    %1553 = vmatprep.subr.mxu0 0.0
    %1554 = vmatpush1.msra.mxu0 0.0
    %1555 = vmatprep.subr.mxu0 0.0
    %1556 = vmatpush1.msra.mxu0 0.0
    %1557 = vmatprep.subr.mxu0 0.0
    %1558 = vmatpush1.msra.mxu0 0.0
    %1559 = vmatprep.subr.mxu0 0.0
    %1560 = vmatpush1.msra.mxu0 0.0
    %1561 = vmatprep.subr.mxu0 0.0
    %1562 = vmatpush1.msra.mxu0 0.0
    %1563 = vmatprep.subr.mxu0 0.0
    %1564 = vmatpush1.msra.mxu0 0.0
    %1565 = vmatprep.subr.mxu0 0.0
    %1566 = vmatpush1.msra.mxu0 0.0
    %1567 = vmatprep.subr.mxu0 0.0
    %1568 = vmatpush1.msra.mxu0 0.0
    %1569 = vmatprep.subr.mxu0 0.0
    %1570 = vmatpush1.msra.mxu0 0.0
    %1571 = vmatprep.subr.mxu0 0.0
    %1572 = vmatpush1.msra.mxu0 %v1337
    %1573 = vmatprep.subr.mxu0 0.0
    %1574 = vmatpush1.msra.mxu0 %v1304
    %1575 = vmatprep.subr.mxu0 0.0
    %1576 = vmatpush1.msra.mxu0 %v1301
    %1577 = vmatprep.subr.mxu0 0.0
    %1578 = vmatpush1.msra.mxu0 %v1298
    %1579 = vmatprep.subr.mxu0 0.0
    %1580 = vmatpush1.msra.mxu0 %v1295
    %1581 = vmatprep.subr.mxu0 0.0
    %1582 = vmatpush1.msra.mxu0 %v1292
    %1583 = vmatprep.subr.mxu0 0.0
    %1584 = vmatpush2.msra.mxu0 0.0
    %1585 = vmatprep.subr.mxu0 0.0
    %1586 = vmatpush2.msra.mxu0 0.0
    %1587 = vmatprep.subr.mxu0 0.0
    %1588 = vmatpush2.msra.mxu0 0.0
    %1589 = vmatprep.subr.mxu0 0.0
    %1590 = vmatpush2.msra.mxu0 0.0
    %1591 = vmatprep.subr.mxu0 0.0
    %1592 = vmatpush2.msra.mxu0 0.0
    %1593 = vmatprep.subr.mxu0 0.0
    %1594 = vmatpush2.msra.mxu0 0.0
    %1595 = vmatprep.subr.mxu0 0.0
    %1596 = vmatpush2.msra.mxu0 0.0
    %1597 = vmatprep.subr.mxu0 0.0
    %1598 = vmatpush2.msra.mxu0 0.0
    %1599 = vmatprep.subr.mxu0 0.0
    %1600 = vmatpush2.msra.mxu0 0.0
    %1601 = vmatprep.subr.mxu0 0.0
    %1602 = vmatpush2.msra.mxu0 0.0
    %1603 = vmatprep.subr.mxu0 0.0
    %1604 = vmatpush2.msra.mxu0 0.0
    %1605 = vmatprep.subr.mxu0 0.0
    %1606 = vmatpush2.msra.mxu0 0.0
    %1607 = vmatprep.subr.mxu0 0.0
    %1608 = vmatpush2.msra.mxu0 0.0
    %1609 = vmatprep.subr.mxu0 0.0
    %1610 = vmatpush2.msra.mxu0 0.0
    %1611 = vmatprep.subr.mxu0 0.0
    %1612 = vmatpush2.msra.mxu0 0.0
    %1613 = vmatprep.subr.mxu0 0.0
    %1614 = vmatpush2.msra.mxu0 0.0
    %1615 = vmatprep.mubr.f32.mxu0 0.0
    %1616 = vmatmul.mubr.f32.gmra.mxu0 %v1327
    %v1617 = vpop.f32.mrf.mxu0
    %v1618 = vadd.f32 %v1548, %v1617
    %v1619 = vpop.f32.mrf.mxu0
    %1620 = vdwg.mxu0
    %v1621 = vmax.f32 %v1477, 0.0
    %v1622 = vmax.f32 %v1479, 0.0
    %v1623 = vmax.f32 %v1618, 0.0
    %v1624 = vld [vmem:[%s12] sm:$0xff]
    %v1625 = vld [vmem:[%s12 + $0x8] sm:$0xff]
    %v1626 = vld [vmem:[%s12 + $0x10] sm:$0xff]
    %v1627 = vld [vmem:[%s12 + $0x18] sm:$0xff]
    %v1628 = vld [vmem:[%s12 + $0x20] sm:$0xff]
    %v1629 = vld [vmem:[%s12 + $0x28] sm:$0xff]
    %v1630 = vld [vmem:[%s12 + $0x30] sm:$0xff]
    %v1631 = vld [vmem:[%s12 + $0x38] sm:$0xff]
    %v1632 = vld [vmem:[%s12 + $0x40] sm:$0xff]
    %v1633 = vld [vmem:[%s12 + $0x48] sm:$0xff]
    %v1634 = vld [vmem:[%s12 + $0x50] sm:$0xff]
    %v1635 = vld [vmem:[%s12 + $0x58] sm:$0xff]
    %v1636 = vld [vmem:[%s12 + $0x60] sm:$0xff]
    %v1637 = vld [vmem:[%s12 + $0x68] sm:$0xff]
    %v1638 = vld [vmem:[%s12 + $0x70] sm:$0xff]
    %v1639 = vld [vmem:[%s12 + $0x78] sm:$0xff]
    %v1640 = vld [vmem:[%s12 + $0x80] sm:$0xff]
    %v1641 = vld [vmem:[%s12 + $0x88] sm:$0xff]
    %v1642 = vld [vmem:[%s12 + $0x90] sm:$0xff]
    %v1643 = vld [vmem:[%s12 + $0x98] sm:$0xff]
    %v1644 = vld [vmem:[%s12 + $0xa0] sm:$0xff]
    %v1645 = vld [vmem:[%s12 + $0xa8] sm:$0xff]
    %v1646 = vld [vmem:[%s12 + $0xb0] sm:$0xff]
    %v1647 = vld [vmem:[%s12 + $0xb8] sm:$0xff]
    %v1648 = vld [vmem:[%s12 + $0xc0] sm:$0xff]
    %v1649 = vld [vmem:[%s12 + $0xc8] sm:$0xff]
    %v1650 = vld [vmem:[%s12 + $0xd0] sm:$0xff]
    %v1651 = vld [vmem:[%s12 + $0xd8] sm:$0xff]
    %v1652 = vld [vmem:[%s12 + $0xe0] sm:$0xff]
    %v1653 = vld [vmem:[%s12 + $0xe8] sm:$0xff]
    %v1654 = vld [vmem:[%s12 + $0xf0] sm:$0xff]
    %v1655 = vld [vmem:[%s12 + $0xf8] sm:$0xff]
    %v1656 = vld [vmem:[%s12 + $0x100] sm:$0xff]
    %v1657 = vld [vmem:[%s12 + $0x108] sm:$0xff]
    %v1658 = vld [vmem:[%s12 + $0x110] sm:$0xff]
    %v1659 = vld [vmem:[%s12 + $0x118] sm:$0xff]
    %v1660 = vld [vmem:[%s12 + $0x120] sm:$0xff]
    %v1661 = vld [vmem:[%s12 + $0x128] sm:$0xf]
    %v1662 = vld [vmem:[%s13] sm:$0x1]
    %v1664 = vlaneseq
    %v1665 = vshrl.u32 %v1664, 7
    %v1666 = vsub.s32 0, %v1665
    %v1667 = vrot.slane %v1662, %v1666
    %v1670 = vsel %vm1325, %v1623, 0
    %v1673 = vsel %vm1329, %v1661, 0
    %1675 = vmatprep.subr.mxu0 0.0
    %1676 = vmatpush1.msra.mxu0 %v1639
    %1677 = vmatprep.subr.mxu0 0.0
    %1678 = vmatpush1.msra.mxu0 %v1638
    %1679 = vmatprep.subr.mxu0 0.0
    %1680 = vmatpush1.msra.mxu0 %v1637
    %1681 = vmatprep.subr.mxu0 0.0
    %1682 = vmatpush1.msra.mxu0 %v1636
    %1683 = vmatprep.subr.mxu0 0.0
    %1684 = vmatpush1.msra.mxu0 %v1635
    %1685 = vmatprep.subr.mxu0 0.0
    %1686 = vmatpush1.msra.mxu0 %v1634
    %1687 = vmatprep.subr.mxu0 0.0
    %1688 = vmatpush1.msra.mxu0 %v1633
    %1689 = vmatprep.subr.mxu0 0.0
    %1690 = vmatpush1.msra.mxu0 %v1632
    %1691 = vmatprep.subr.mxu0 0.0
    %1692 = vmatpush1.msra.mxu0 %v1631
    %1693 = vmatprep.subr.mxu0 0.0
    %1694 = vmatpush1.msra.mxu0 %v1630
    %1695 = vmatprep.subr.mxu0 0.0
    %1696 = vmatpush1.msra.mxu0 %v1629
    %1697 = vmatprep.subr.mxu0 0.0
    %1698 = vmatpush1.msra.mxu0 %v1628
    %1699 = vmatprep.subr.mxu0 0.0
    %1700 = vmatpush1.msra.mxu0 %v1627
    %1701 = vmatprep.subr.mxu0 0.0
    %1702 = vmatpush1.msra.mxu0 %v1626
    %1703 = vmatprep.subr.mxu0 0.0
    %1704 = vmatpush1.msra.mxu0 %v1625
    %1705 = vmatprep.subr.mxu0 0.0
    %1706 = vmatpush1.msra.mxu0 %v1624
    %1707 = vmatprep.subr.mxu0 0.0
    %1708 = vmatpush2.msra.mxu0 %v1655
    %1709 = vmatprep.subr.mxu0 0.0
    %1710 = vmatpush2.msra.mxu0 %v1654
    %1711 = vmatprep.subr.mxu0 0.0
    %1712 = vmatpush2.msra.mxu0 %v1653
    %1713 = vmatprep.subr.mxu0 0.0
    %1714 = vmatpush2.msra.mxu0 %v1652
    %1715 = vmatprep.subr.mxu0 0.0
    %1716 = vmatpush2.msra.mxu0 %v1651
    %1717 = vmatprep.subr.mxu0 0.0
    %1718 = vmatpush2.msra.mxu0 %v1650
    %1719 = vmatprep.subr.mxu0 0.0
    %1720 = vmatpush2.msra.mxu0 %v1649
    %1721 = vmatprep.subr.mxu0 0.0
    %1722 = vmatpush2.msra.mxu0 %v1648
    %1723 = vmatprep.subr.mxu0 0.0
    %1724 = vmatpush2.msra.mxu0 %v1647
    %1725 = vmatprep.subr.mxu0 0.0
    %1726 = vmatpush2.msra.mxu0 %v1646
    %1727 = vmatprep.subr.mxu0 0.0
    %1728 = vmatpush2.msra.mxu0 %v1645
    %1729 = vmatprep.subr.mxu0 0.0
    %1730 = vmatpush2.msra.mxu0 %v1644
    %1731 = vmatprep.subr.mxu0 0.0
    %1732 = vmatpush2.msra.mxu0 %v1643
    %1733 = vmatprep.subr.mxu0 0.0
    %1734 = vmatpush2.msra.mxu0 %v1642
    %1735 = vmatprep.subr.mxu0 0.0
    %1736 = vmatpush2.msra.mxu0 %v1641
    %1737 = vmatprep.subr.mxu0 0.0
    %1738 = vmatpush2.msra.mxu0 %v1640
    %1739 = vmatprep.mubr.f32.mxu0 %v1622
    %1740 = vmatmul.mubr.f32.gmra.mxu0 %v1621
    %v1741 = vpop.f32.mrf.mxu0
    %v1742 = vadd.f32 %v1667, %v1741
    %v1743 = vpop.f32.mrf.mxu0
    %1744 = vdwg.mxu0
    %1745 = vmatprep.subr.mxu0 0.0
    %1746 = vmatpush1.msra.mxu0 0.0
    %1747 = vmatprep.subr.mxu0 0.0
    %1748 = vmatpush1.msra.mxu0 0.0
    %1749 = vmatprep.subr.mxu0 0.0
    %1750 = vmatpush1.msra.mxu0 0.0
    %1751 = vmatprep.subr.mxu0 0.0
    %1752 = vmatpush1.msra.mxu0 0.0
    %1753 = vmatprep.subr.mxu0 0.0
    %1754 = vmatpush1.msra.mxu0 0.0
    %1755 = vmatprep.subr.mxu0 0.0
    %1756 = vmatpush1.msra.mxu0 0.0
    %1757 = vmatprep.subr.mxu0 0.0
    %1758 = vmatpush1.msra.mxu0 0.0
    %1759 = vmatprep.subr.mxu0 0.0
    %1760 = vmatpush1.msra.mxu0 0.0
    %1761 = vmatprep.subr.mxu0 0.0
    %1762 = vmatpush1.msra.mxu0 0.0
    %1763 = vmatprep.subr.mxu0 0.0
    %1764 = vmatpush1.msra.mxu0 0.0
    %1765 = vmatprep.subr.mxu0 0.0
    %1766 = vmatpush1.msra.mxu0 %v1673
    %1767 = vmatprep.subr.mxu0 0.0
    %1768 = vmatpush1.msra.mxu0 %v1660
    %1769 = vmatprep.subr.mxu0 0.0
    %1770 = vmatpush1.msra.mxu0 %v1659
    %1771 = vmatprep.subr.mxu0 0.0
    %1772 = vmatpush1.msra.mxu0 %v1658
    %1773 = vmatprep.subr.mxu0 0.0
    %1774 = vmatpush1.msra.mxu0 %v1657
    %1775 = vmatprep.subr.mxu0 0.0
    %1776 = vmatpush1.msra.mxu0 %v1656
    %1777 = vmatprep.subr.mxu0 0.0
    %1778 = vmatpush2.msra.mxu0 0.0
    %1779 = vmatprep.subr.mxu0 0.0
    %1780 = vmatpush2.msra.mxu0 0.0
    %1781 = vmatprep.subr.mxu0 0.0
    %1782 = vmatpush2.msra.mxu0 0.0
    %1783 = vmatprep.subr.mxu0 0.0
    %1784 = vmatpush2.msra.mxu0 0.0
    %1785 = vmatprep.subr.mxu0 0.0
    %1786 = vmatpush2.msra.mxu0 0.0
    %1787 = vmatprep.subr.mxu0 0.0
    %1788 = vmatpush2.msra.mxu0 0.0
    %1789 = vmatprep.subr.mxu0 0.0
    %1790 = vmatpush2.msra.mxu0 0.0
    %1791 = vmatprep.subr.mxu0 0.0
    %1792 = vmatpush2.msra.mxu0 0.0
    %1793 = vmatprep.subr.mxu0 0.0
    %1794 = vmatpush2.msra.mxu0 0.0
    %1795 = vmatprep.subr.mxu0 0.0
    %1796 = vmatpush2.msra.mxu0 0.0
    %1797 = vmatprep.subr.mxu0 0.0
    %1798 = vmatpush2.msra.mxu0 0.0
    %1799 = vmatprep.subr.mxu0 0.0
    %1800 = vmatpush2.msra.mxu0 0.0
    %1801 = vmatprep.subr.mxu0 0.0
    %1802 = vmatpush2.msra.mxu0 0.0
    %1803 = vmatprep.subr.mxu0 0.0
    %1804 = vmatpush2.msra.mxu0 0.0
    %1805 = vmatprep.subr.mxu0 0.0
    %1806 = vmatpush2.msra.mxu0 0.0
    %1807 = vmatprep.subr.mxu0 0.0
    %1808 = vmatpush2.msra.mxu0 0.0
    %1809 = vmatprep.mubr.f32.mxu0 0.0
    %1810 = vmatmul.mubr.f32.gmra.mxu0 %v1670
    %v1811 = vpop.f32.mrf.mxu0
    %v1812 = vadd.f32 %v1742, %v1811
    %v1813 = vpop.f32.mrf.mxu0
    %1814 = vdwg.mxu0
    %vm1815 = vcmask 9216
    %1816 = vst.msk [vmem:[#allocation2] sm:$0x3] %vm1815, %v1812
    // Predicated region
    $region58: #{forward.3} parent=1 // pred_check
      _
    $region59: #{forward.3} parent=1 // pred_check_branch
      %1818 = sbr.rel (0) target = $region61
    $region60: #{forward.3} parent=1 // pred_region
      _
    $region61: #{forward.3} parent=1 // pred_fallthru
      _
    // Predicated region
    $region62: #{forward.3} parent=1 // pred_check
      _
    $region63: #{forward.3} parent=1 // pred_check_branch
      %1820 = sbr.rel (0) target = $region65
    $region64: #{forward.3} parent=1 // pred_region
      %s1822 = ssub.s32 32, 32
      %1823 = vsyncadd [#allocation3], %s1822
      %s1825 = sshll.u32 [#allocation2], 4
      %s1826 = int_to_ptr.vmem [resolvable:$true] %s1825
      %1828 = dma.vmem_to_hbm [thread:$0]  %s1826, 32, %s15, [#allocation3]
    $region65: #{forward.3} parent=1 // pred_fallthru
      _
    // Predicated region
    $region66: #{forward.3} parent=1 // pred_check
      _
    $region67: #{forward.3} parent=1 // pred_check_branch
      %1830 = sbr.rel (0) target = $region69
    $region68: #{forward.3} parent=1 // pred_region
      _
    $region69: #{forward.3} parent=1 // pred_fallthru
      _
    // Predicated region
    $region70: #{forward.3} parent=1 // pred_check
      _
    $region71: #{forward.3} parent=1 // pred_check_branch
      %1832 = sbr.rel (0) target = $region73
    $region72: #{forward.3} parent=1 // pred_region
      %1833 = dma.done [#allocation3], 32
    $region73: #{forward.3} parent=1 // pred_fallthru
      _
    %1834 = vsyncpa [#allocation3], 1

</llo_original>
